<compile_context>
chip_gen: v7x
topology: tpu7x:2x2x1
jax: 0.10.0
libtpu: 0.0.40
codegen_flags: <defaults>
</compile_context>

<pallas_src>
import functools
import math

import jax
import jax.numpy as jnp
from jax import lax
from jax.experimental import pallas as pl
from jax.experimental.pallas import tpu as pltpu


# ----------------------------------------------------------------------------
# Fused kernel: projections + multi-head attention + output projection,
# one (batch) element per grid step.
# ----------------------------------------------------------------------------
def _fused_attn_kernel(q_ref, k_ref, v_ref, mask_ref,
                       wq_ref, wk_ref, wv_ref, wo_ref,
                       out_ref, attn_ref, *, n_heads, head_dim):
    xq = q_ref[0]                      # (Lq, D)
    xk = k_ref[0]                      # (Lk, D)
    xv = v_ref[0]                      # (Lk, D)
    neg_mask = mask_ref[0] != 0        # (Lq, Lk) bool, True => masked out

    # Projections on the MXU. 1/scale is already folded into wq_ref.
    q_p = jnp.dot(xq, wq_ref[...], preferred_element_type=jnp.float32)   # (Lq, D)
    k_p = jnp.dot(xk, wk_ref[...], preferred_element_type=jnp.float32)   # (Lk, D)
    v_p = jnp.dot(xv, wv_ref[...], preferred_element_type=jnp.float32)   # (Lk, D)

    lq = xq.shape[0]
    d = xq.shape[1]
    out = jnp.zeros((lq, d), jnp.float32)

    # Static loop over heads (n_heads is a compile-time constant).
    for h in range(n_heads):
        sl = slice(h * head_dim, (h + 1) * head_dim)
        qh = q_p[:, sl]                # (Lq, hd)
        kh = k_p[:, sl]                # (Lk, hd)
        vh = v_p[:, sl]                # (Lk, hd)

        # scores = qh @ kh^T without materializing a transpose.
        s = lax.dot_general(qh, kh, (((1,), (1,)), ((), ())),
                            preferred_element_type=jnp.float32)          # (Lq, Lk)
        s = jnp.where(neg_mask, jnp.float32(-1.0e9), s)

        s_max = jnp.max(s, axis=-1, keepdims=True)
        p = jnp.exp(s - s_max)
        denom = jnp.sum(p, axis=-1, keepdims=True)
        attn = p / denom                                                  # softmax(-1)

        # Attention weights are part of the module's return contract.
        attn_ref[0, h] = attn.astype(attn_ref.dtype)

        o_h = jnp.dot(attn, vh, preferred_element_type=jnp.float32)      # (Lq, hd)
        # Head -> model_dim concat folded into the output projection:
        # concat(o_h) @ Wo^T  ==  sum_h o_h @ Wo^T[h*hd:(h+1)*hd, :]
        out = out + jnp.dot(o_h, wo_ref[sl, :],
                            preferred_element_type=jnp.float32)          # (Lq, D)

    out_ref[0] = out.astype(out_ref.dtype)


def fused_mha(qb, kb, vb, mask_i8, wq_t_scaled, wk_t, wv_t, wo_t, *, n_heads):
    """qb/kb/vb: (B, L, D) f32; mask_i8: (B, Lq, Lk) int8; w*_t: (D, D) f32."""
    B, Lq, D = qb.shape
    Lk = kb.shape[1]
    hd = D // n_heads

    kernel = functools.partial(_fused_attn_kernel, n_heads=n_heads, head_dim=hd)

    out_bld, attn = pl.pallas_call(
        kernel,
        out_shape=(
            jax.ShapeDtypeStruct((B, Lq, D), qb.dtype),
            jax.ShapeDtypeStruct((B, n_heads, Lq, Lk), jnp.float32),
        ),
        grid=(B,),
        in_specs=[
            pl.BlockSpec((1, Lq, D), lambda b: (b, 0, 0)),
            pl.BlockSpec((1, Lk, D), lambda b: (b, 0, 0)),
            pl.BlockSpec((1, Lk, D), lambda b: (b, 0, 0)),
            pl.BlockSpec((1, Lq, Lk), lambda b: (b, 0, 0)),
            # Weights: constant block index -> fetched once, reused across grid.
            pl.BlockSpec((D, D), lambda b: (0, 0)),
            pl.BlockSpec((D, D), lambda b: (0, 0)),
            pl.BlockSpec((D, D), lambda b: (0, 0)),
            pl.BlockSpec((D, D), lambda b: (0, 0)),
        ],
        out_specs=(
            pl.BlockSpec((1, Lq, D), lambda b: (b, 0, 0)),              # lane-dense D
            pl.BlockSpec((1, n_heads, Lq, Lk), lambda b: (b, 0, 0, 0)),
        ),
        compiler_params=pltpu.CompilerParams(
            dimension_semantics=("parallel",)
        ),
    )(qb, kb, vb, mask_i8, wq_t_scaled, wk_t, wv_t, wo_t)
    return out_bld, attn


# ----------------------------------------------------------------------------
# Module wrapper (parameter init + thin glue in plain JAX).
# ----------------------------------------------------------------------------
def _xavier_uniform(key, shape, gain):
    fan_out, fan_in = shape
    bound = gain * math.sqrt(6.0 / (fan_in + fan_out))
    return jax.random.uniform(key, shape, jnp.float32, -bound, bound)


class ScaledDotAttention:
    def __init__(self, model_dim, n_heads, key, dropout=0.0):
        assert model_dim % n_heads == 0
        self.model_dim = model_dim
        self.n_heads = n_heads
        self.head_dim = model_dim // n_heads
        self.scale = math.sqrt(self.head_dim)
        # TODO(synk): dropout>0 would need pltpu.prng_*; p=0.0 here => identity.
        self.dropout = dropout

        kk, kq, kv, ko = jax.random.split(key, 4)
        g = 1.0 / math.sqrt(2.0)
        # PyTorch convention: weight is (out_dim, in_dim), y = x @ W^T.
        self.w_k = _xavier_uniform(kk, (model_dim, model_dim), g)
        self.w_q = _xavier_uniform(kq, (model_dim, model_dim), g)
        self.w_v = _xavier_uniform(kv, (model_dim, model_dim), g)
        self.w_o = _xavier_uniform(ko, (model_dim, model_dim), 1.0)

        # Pre-transpose once; fold 1/scale into the query projection.
        self.wq_t_scaled = jnp.asarray((self.w_q / self.scale).T)
        self.wk_t = jnp.asarray(self.w_k.T)
        self.wv_t = jnp.asarray(self.w_v.T)
        self.wo_t = jnp.asarray(self.w_o.T)

    def __call__(self, inputs):
        q, k, v, mask = inputs          # q/k/v: (L, B, D); mask: (B, Lq, Lk) or None
        q_len, bsize, _ = q.shape
        k_len = k.shape[0]

        # Batch-major for per-batch grid blocks (small one-time XLA transposes;
        # everything downstream stays inside the single fused kernel).
        qb = jnp.transpose(q, (1, 0, 2))
        kb = jnp.transpose(k, (1, 0, 2))
        vb = jnp.transpose(v, (1, 0, 2))

        if mask is None:
            mask_i8 = jnp.zeros((bsize, q_len, k_len), jnp.int8)
        else:
            mask_i8 = jnp.broadcast_to(mask, (bsize, q_len, k_len)).astype(jnp.int8)

        out_bld, attn_weights = fused_mha(
            qb, kb, vb, mask_i8,
            self.wq_t_scaled, self.wk_t, self.wv_t, self.wo_t,
            n_heads=self.n_heads,
        )

        out = jnp.transpose(out_bld, (1, 0, 2))   # (Lq, B, D) as in the module
        return out, attn_weights


# ----------------------------------------------------------------------------
# Pure-JAX reference for correctness check (uses original weights + scale).
# ----------------------------------------------------------------------------
def _reference(module, q, k, v, mask):
    L, B, D = q.shape
    H, hd = module.n_heads, module.head_dim

    def proj_heads(x, w):
        y = x @ w.T
        return jnp.transpose(y.reshape(x.shape[0], B, H, hd), (1, 2, 0, 3))

    Q = proj_heads(q, module.w_q)
    K = proj_heads(k, module.w_k)
    V = proj_heads(v, module.w_v)
    s = jnp.einsum("bhqd,bhkd->bhqk", Q / module.scale, K)
    s = jnp.where(mask[:, None, :, :], -1.0e9, s)
    attn = jax.nn.softmax(s, axis=-1)
    sc = jnp.einsum("bhqk,bhkd->bhqd", attn, V)
    concat = jnp.transpose(sc, (2, 0, 1, 3)).reshape(L, B, D)
    return concat @ module.w_o.T, attn


if __name__ == "__main__":
    key = jax.random.PRNGKey(0)
    k_params, k_q, k_k, k_v, k_m = jax.random.split(key, 5)

    seq_len, bsize, model_dim, n_heads = 8, 2, 32, 4

    module = ScaledDotAttention(model_dim, n_heads, k_params, dropout=0.0)

    q = jax.random.normal(k_q, (seq_len, bsize, model_dim), jnp.float32)
    k = jax.random.normal(k_k, (seq_len, bsize, model_dim), jnp.float32)
    v = jax.random.normal(k_v, (seq_len, bsize, model_dim), jnp.float32)
    # boolean mask, True == masked out; keep at least one unmasked key per row
    mask = jax.random.bernoulli(k_m, 0.3, (bsize, seq_len, seq_len))
    mask = mask.at[:, :, 0].set(False)

    out, attn = module((q, k, v, mask))
    out = jax.block_until_ready(out)
    attn = jax.block_until_ready(attn)

    ref_out, ref_attn = _reference(module, q, k, v, mask)
    assert out.shape == (seq_len, bsize, model_dim)
    assert attn.shape == (bsize, n_heads, seq_len, seq_len)
    assert jnp.allclose(out, ref_out, atol=1e-5, rtol=1e-5)
    assert jnp.allclose(attn, ref_attn, atol=1e-5, rtol=1e-5)

    print("KERNEL_OK")
</pallas_src>

<mosaic_0001>
module attributes {stable_mosaic.version = 11 : i64} {
  func.func @_fused_attn_kernel(%arg0: i32, %arg1: memref<1x8x32xf32, #tpu.memory_space<vmem>>, %arg2: memref<1x8x32xf32, #tpu.memory_space<vmem>>, %arg3: memref<1x8x32xf32, #tpu.memory_space<vmem>>, %arg4: memref<1x8x8xi8, #tpu.memory_space<vmem>>, %arg5: memref<32x32xf32, #tpu.memory_space<vmem>>, %arg6: memref<32x32xf32, #tpu.memory_space<vmem>>, %arg7: memref<32x32xf32, #tpu.memory_space<vmem>>, %arg8: memref<32x32xf32, #tpu.memory_space<vmem>>, %arg9: memref<1x8x32xf32, #tpu.memory_space<vmem>>, %arg10: memref<1x4x8x8xf32, #tpu.memory_space<vmem>>) attributes {dimension_semantics = [#tpu.dimension_semantics<parallel>], iteration_bounds = array<i64: 2>, scalar_prefetch = 0 : i64, scratch_operands = 0 : i64, tpu.core_type = #tpu.core_type<tc>, window_params = [{transform_indices = @transform_0, window_bounds = array<i64: 1, 8, 32>}, {transform_indices = @transform_1, window_bounds = array<i64: 1, 8, 32>}, {transform_indices = @transform_2, window_bounds = array<i64: 1, 8, 32>}, {transform_indices = @transform_3, window_bounds = array<i64: 1, 8, 8>}, {pipeline_mode = #tpu.pipeline_mode<synchronous>, transform_indices = @transform_4, window_bounds = array<i64: 32, 32>}, {pipeline_mode = #tpu.pipeline_mode<synchronous>, transform_indices = @transform_5, window_bounds = array<i64: 32, 32>}, {pipeline_mode = #tpu.pipeline_mode<synchronous>, transform_indices = @transform_6, window_bounds = array<i64: 32, 32>}, {pipeline_mode = #tpu.pipeline_mode<synchronous>, transform_indices = @transform_7, window_bounds = array<i64: 32, 32>}, {transform_indices = @transform_8, window_bounds = array<i64: 1, 8, 32>}, {transform_indices = @transform_9, window_bounds = array<i64: 1, 4, 8, 8>}]} {
    %c0 = arith.constant 0 : index
    %c0_0 = arith.constant 0 : index
    %c0_1 = arith.constant 0 : index
    %0 = vector.load %arg1[%c0, %c0_0, %c0_1] : memref<1x8x32xf32, #tpu.memory_space<vmem>>, vector<1x8x32xf32>
    %1 = vector.shape_cast %0 : vector<1x8x32xf32> to vector<8x32xf32>
    %c0_2 = arith.constant 0 : index
    %c0_3 = arith.constant 0 : index
    %c0_4 = arith.constant 0 : index
    %2 = vector.load %arg2[%c0_2, %c0_3, %c0_4] : memref<1x8x32xf32, #tpu.memory_space<vmem>>, vector<1x8x32xf32>
    %3 = vector.shape_cast %2 : vector<1x8x32xf32> to vector<8x32xf32>
    %c0_5 = arith.constant 0 : index
    %c0_6 = arith.constant 0 : index
    %c0_7 = arith.constant 0 : index
    %4 = vector.load %arg3[%c0_5, %c0_6, %c0_7] : memref<1x8x32xf32, #tpu.memory_space<vmem>>, vector<1x8x32xf32>
    %5 = vector.shape_cast %4 : vector<1x8x32xf32> to vector<8x32xf32>
    %c0_8 = arith.constant 0 : index
    %c0_9 = arith.constant 0 : index
    %c0_10 = arith.constant 0 : index
    %6 = vector.load %arg4[%c0_8, %c0_9, %c0_10] : memref<1x8x8xi8, #tpu.memory_space<vmem>>, vector<1x8x8xi8>
    %7 = vector.shape_cast %6 : vector<1x8x8xi8> to vector<8x8xi8>
    %c0_i8 = arith.constant 0 : i8
    %8 = vector.broadcast %c0_i8 : i8 to vector<8x8xi8>
    %9 = arith.cmpi ne, %7, %8 : vector<8x8xi8>
    %c0_11 = arith.constant 0 : index
    %c0_12 = arith.constant 0 : index
    %10 = vector.load %arg5[%c0_11, %c0_12] : memref<32x32xf32, #tpu.memory_space<vmem>>, vector<32x32xf32>
    %cst = arith.constant dense<0.000000e+00> : vector<8x32xf32>
    %11 = tpu.matmul %1, %10, %cst {dimension_numbers = #tpu.dot_dimension_numbers<[1], [0], [0], [1], [0, 0, 1, 1], [], []>} : vector<8x32xf32>, vector<32x32xf32>, vector<8x32xf32> -> vector<8x32xf32>
    %c0_13 = arith.constant 0 : index
    %c0_14 = arith.constant 0 : index
    %12 = vector.load %arg6[%c0_13, %c0_14] : memref<32x32xf32, #tpu.memory_space<vmem>>, vector<32x32xf32>
    %cst_15 = arith.constant dense<0.000000e+00> : vector<8x32xf32>
    %13 = tpu.matmul %3, %12, %cst_15 {dimension_numbers = #tpu.dot_dimension_numbers<[1], [0], [0], [1], [0, 0, 1, 1], [], []>} : vector<8x32xf32>, vector<32x32xf32>, vector<8x32xf32> -> vector<8x32xf32>
    %c0_16 = arith.constant 0 : index
    %c0_17 = arith.constant 0 : index
    %14 = vector.load %arg7[%c0_16, %c0_17] : memref<32x32xf32, #tpu.memory_space<vmem>>, vector<32x32xf32>
    %cst_18 = arith.constant dense<0.000000e+00> : vector<8x32xf32>
    %15 = tpu.matmul %5, %14, %cst_18 {dimension_numbers = #tpu.dot_dimension_numbers<[1], [0], [0], [1], [0, 0, 1, 1], [], []>} : vector<8x32xf32>, vector<32x32xf32>, vector<8x32xf32> -> vector<8x32xf32>
    %cst_19 = arith.constant 0.000000e+00 : f32
    %16 = vector.broadcast %cst_19 : f32 to vector<8x32xf32>
    %17 = vector.extract_strided_slice %11 {offsets = [0, 0], sizes = [8, 8], strides = [1, 1]} : vector<8x32xf32> to vector<8x8xf32>
    %18 = vector.extract_strided_slice %13 {offsets = [0, 0], sizes = [8, 8], strides = [1, 1]} : vector<8x32xf32> to vector<8x8xf32>
    %19 = vector.extract_strided_slice %15 {offsets = [0, 0], sizes = [8, 8], strides = [1, 1]} : vector<8x32xf32> to vector<8x8xf32>
    %cst_20 = arith.constant dense<0.000000e+00> : vector<8x8xf32>
    %20 = tpu.matmul %17, %18, %cst_20 {dimension_numbers = #tpu.dot_dimension_numbers<[1], [1], [0], [0], [0, 0, 1, 0], [], []>} : vector<8x8xf32>, vector<8x8xf32>, vector<8x8xf32> -> vector<8x8xf32>
    %cst_21 = arith.constant -1.000000e+09 : f32
    %21 = vector.broadcast %cst_21 : f32 to vector<8x8xf32>
    %22 = arith.select %9, %21, %20 : vector<8x8xi1>, vector<8x8xf32>
    %cst_22 = arith.constant dense<0xFF800000> : vector<8xf32>
    %23 = vector.multi_reduction <maximumf>, %22, %cst_22 [1] : vector<8x8xf32> to vector<8xf32>
    %24 = vector.shape_cast %23 : vector<8xf32> to vector<8x1xf32>
    %25 = vector.broadcast %24 : vector<8x1xf32> to vector<8x8xf32>
    %26 = arith.subf %22, %25 : vector<8x8xf32>
    %27 = math.exp %26 : vector<8x8xf32>
    %cst_23 = arith.constant dense<0.000000e+00> : vector<8xf32>
    %28 = vector.multi_reduction <add>, %27, %cst_23 [1] : vector<8x8xf32> to vector<8xf32>
    %29 = vector.shape_cast %28 : vector<8xf32> to vector<8x1xf32>
    %30 = vector.broadcast %29 : vector<8x1xf32> to vector<8x8xf32>
    %31 = arith.divf %27, %30 : vector<8x8xf32>
    %c0_24 = arith.constant 0 : index
    %c0_25 = arith.constant 0 : index
    %c0_26 = arith.constant 0 : index
    %c0_27 = arith.constant 0 : index
    %32 = vector.load %arg10[%c0_24, %c0_25, %c0_26, %c0_27] : memref<1x4x8x8xf32, #tpu.memory_space<vmem>>, vector<1x1x8x8xf32>
    %33 = vector.shape_cast %32 : vector<1x1x8x8xf32> to vector<8x8xf32>
    %34 = vector.shape_cast %31 : vector<8x8xf32> to vector<1x1x8x8xf32>
    tpu.vector_store %arg10[%c0_24, %c0_25, %c0_26, %c0_27], %34 {strides = array<i32>} : memref<1x4x8x8xf32, #tpu.memory_space<vmem>>, vector<1x1x8x8xf32>,
    %cst_28 = arith.constant dense<0.000000e+00> : vector<8x8xf32>
    %35 = tpu.matmul %31, %19, %cst_28 {dimension_numbers = #tpu.dot_dimension_numbers<[1], [0], [0], [1], [0, 0, 1, 1], [], []>} : vector<8x8xf32>, vector<8x8xf32>, vector<8x8xf32> -> vector<8x8xf32>
    %c0_29 = arith.constant 0 : index
    %c0_30 = arith.constant 0 : index
    %36 = vector.load %arg8[%c0_29, %c0_30] : memref<32x32xf32, #tpu.memory_space<vmem>>, vector<8x32xf32>
    %cst_31 = arith.constant dense<0.000000e+00> : vector<8x32xf32>
    %37 = tpu.matmul %35, %36, %cst_31 {dimension_numbers = #tpu.dot_dimension_numbers<[1], [0], [0], [1], [0, 0, 1, 1], [], []>} : vector<8x8xf32>, vector<8x32xf32>, vector<8x32xf32> -> vector<8x32xf32>
    %38 = arith.addf %16, %37 : vector<8x32xf32>
    %39 = vector.extract_strided_slice %11 {offsets = [0, 8], sizes = [8, 8], strides = [1, 1]} : vector<8x32xf32> to vector<8x8xf32>
    %40 = vector.extract_strided_slice %13 {offsets = [0, 8], sizes = [8, 8], strides = [1, 1]} : vector<8x32xf32> to vector<8x8xf32>
    %41 = vector.extract_strided_slice %15 {offsets = [0, 8], sizes = [8, 8], strides = [1, 1]} : vector<8x32xf32> to vector<8x8xf32>
    %cst_32 = arith.constant dense<0.000000e+00> : vector<8x8xf32>
    %42 = tpu.matmul %39, %40, %cst_32 {dimension_numbers = #tpu.dot_dimension_numbers<[1], [1], [0], [0], [0, 0, 1, 0], [], []>} : vector<8x8xf32>, vector<8x8xf32>, vector<8x8xf32> -> vector<8x8xf32>
    %cst_33 = arith.constant -1.000000e+09 : f32
    %43 = vector.broadcast %cst_33 : f32 to vector<8x8xf32>
    %44 = arith.select %9, %43, %42 : vector<8x8xi1>, vector<8x8xf32>
    %cst_34 = arith.constant dense<0xFF800000> : vector<8xf32>
    %45 = vector.multi_reduction <maximumf>, %44, %cst_34 [1] : vector<8x8xf32> to vector<8xf32>
    %46 = vector.shape_cast %45 : vector<8xf32> to vector<8x1xf32>
    %47 = vector.broadcast %46 : vector<8x1xf32> to vector<8x8xf32>
    %48 = arith.subf %44, %47 : vector<8x8xf32>
    %49 = math.exp %48 : vector<8x8xf32>
    %cst_35 = arith.constant dense<0.000000e+00> : vector<8xf32>
    %50 = vector.multi_reduction <add>, %49, %cst_35 [1] : vector<8x8xf32> to vector<8xf32>
    %51 = vector.shape_cast %50 : vector<8xf32> to vector<8x1xf32>
    %52 = vector.broadcast %51 : vector<8x1xf32> to vector<8x8xf32>
    %53 = arith.divf %49, %52 : vector<8x8xf32>
    %c0_36 = arith.constant 0 : index
    %c1 = arith.constant 1 : index
    %c0_37 = arith.constant 0 : index
    %c0_38 = arith.constant 0 : index
    %54 = vector.load %arg10[%c0_36, %c1, %c0_37, %c0_38] : memref<1x4x8x8xf32, #tpu.memory_space<vmem>>, vector<1x1x8x8xf32>
    %55 = vector.shape_cast %54 : vector<1x1x8x8xf32> to vector<8x8xf32>
    %56 = vector.shape_cast %53 : vector<8x8xf32> to vector<1x1x8x8xf32>
    tpu.vector_store %arg10[%c0_36, %c1, %c0_37, %c0_38], %56 {strides = array<i32>} : memref<1x4x8x8xf32, #tpu.memory_space<vmem>>, vector<1x1x8x8xf32>,
    %cst_39 = arith.constant dense<0.000000e+00> : vector<8x8xf32>
    %57 = tpu.matmul %53, %41, %cst_39 {dimension_numbers = #tpu.dot_dimension_numbers<[1], [0], [0], [1], [0, 0, 1, 1], [], []>} : vector<8x8xf32>, vector<8x8xf32>, vector<8x8xf32> -> vector<8x8xf32>
    %c8 = arith.constant 8 : index
    %c0_40 = arith.constant 0 : index
    %58 = vector.load %arg8[%c8, %c0_40] : memref<32x32xf32, #tpu.memory_space<vmem>>, vector<8x32xf32>
    %cst_41 = arith.constant dense<0.000000e+00> : vector<8x32xf32>
    %59 = tpu.matmul %57, %58, %cst_41 {dimension_numbers = #tpu.dot_dimension_numbers<[1], [0], [0], [1], [0, 0, 1, 1], [], []>} : vector<8x8xf32>, vector<8x32xf32>, vector<8x32xf32> -> vector<8x32xf32>
    %60 = arith.addf %38, %59 : vector<8x32xf32>
    %61 = vector.extract_strided_slice %11 {offsets = [0, 16], sizes = [8, 8], strides = [1, 1]} : vector<8x32xf32> to vector<8x8xf32>
    %62 = vector.extract_strided_slice %13 {offsets = [0, 16], sizes = [8, 8], strides = [1, 1]} : vector<8x32xf32> to vector<8x8xf32>
    %63 = vector.extract_strided_slice %15 {offsets = [0, 16], sizes = [8, 8], strides = [1, 1]} : vector<8x32xf32> to vector<8x8xf32>
    %cst_42 = arith.constant dense<0.000000e+00> : vector<8x8xf32>
    %64 = tpu.matmul %61, %62, %cst_42 {dimension_numbers = #tpu.dot_dimension_numbers<[1], [1], [0], [0], [0, 0, 1, 0], [], []>} : vector<8x8xf32>, vector<8x8xf32>, vector<8x8xf32> -> vector<8x8xf32>
    %cst_43 = arith.constant -1.000000e+09 : f32
    %65 = vector.broadcast %cst_43 : f32 to vector<8x8xf32>
    %66 = arith.select %9, %65, %64 : vector<8x8xi1>, vector<8x8xf32>
    %cst_44 = arith.constant dense<0xFF800000> : vector<8xf32>
    %67 = vector.multi_reduction <maximumf>, %66, %cst_44 [1] : vector<8x8xf32> to vector<8xf32>
    %68 = vector.shape_cast %67 : vector<8xf32> to vector<8x1xf32>
    %69 = vector.broadcast %68 : vector<8x1xf32> to vector<8x8xf32>
    %70 = arith.subf %66, %69 : vector<8x8xf32>
    %71 = math.exp %70 : vector<8x8xf32>
    %cst_45 = arith.constant dense<0.000000e+00> : vector<8xf32>
    %72 = vector.multi_reduction <add>, %71, %cst_45 [1] : vector<8x8xf32> to vector<8xf32>
    %73 = vector.shape_cast %72 : vector<8xf32> to vector<8x1xf32>
    %74 = vector.broadcast %73 : vector<8x1xf32> to vector<8x8xf32>
    %75 = arith.divf %71, %74 : vector<8x8xf32>
    %c0_46 = arith.constant 0 : index
    %c2 = arith.constant 2 : index
    %c0_47 = arith.constant 0 : index
    %c0_48 = arith.constant 0 : index
    %76 = vector.load %arg10[%c0_46, %c2, %c0_47, %c0_48] : memref<1x4x8x8xf32, #tpu.memory_space<vmem>>, vector<1x1x8x8xf32>
    %77 = vector.shape_cast %76 : vector<1x1x8x8xf32> to vector<8x8xf32>
    %78 = vector.shape_cast %75 : vector<8x8xf32> to vector<1x1x8x8xf32>
    tpu.vector_store %arg10[%c0_46, %c2, %c0_47, %c0_48], %78 {strides = array<i32>} : memref<1x4x8x8xf32, #tpu.memory_space<vmem>>, vector<1x1x8x8xf32>,
    %cst_49 = arith.constant dense<0.000000e+00> : vector<8x8xf32>
    %79 = tpu.matmul %75, %63, %cst_49 {dimension_numbers = #tpu.dot_dimension_numbers<[1], [0], [0], [1], [0, 0, 1, 1], [], []>} : vector<8x8xf32>, vector<8x8xf32>, vector<8x8xf32> -> vector<8x8xf32>
    %c16 = arith.constant 16 : index
    %c0_50 = arith.constant 0 : index
    %80 = vector.load %arg8[%c16, %c0_50] : memref<32x32xf32, #tpu.memory_space<vmem>>, vector<8x32xf32>
    %cst_51 = arith.constant dense<0.000000e+00> : vector<8x32xf32>
    %81 = tpu.matmul %79, %80, %cst_51 {dimension_numbers = #tpu.dot_dimension_numbers<[1], [0], [0], [1], [0, 0, 1, 1], [], []>} : vector<8x8xf32>, vector<8x32xf32>, vector<8x32xf32> -> vector<8x32xf32>
    %82 = arith.addf %60, %81 : vector<8x32xf32>
    %83 = vector.extract_strided_slice %11 {offsets = [0, 24], sizes = [8, 8], strides = [1, 1]} : vector<8x32xf32> to vector<8x8xf32>
    %84 = vector.extract_strided_slice %13 {offsets = [0, 24], sizes = [8, 8], strides = [1, 1]} : vector<8x32xf32> to vector<8x8xf32>
    %85 = vector.extract_strided_slice %15 {offsets = [0, 24], sizes = [8, 8], strides = [1, 1]} : vector<8x32xf32> to vector<8x8xf32>
    %cst_52 = arith.constant dense<0.000000e+00> : vector<8x8xf32>
    %86 = tpu.matmul %83, %84, %cst_52 {dimension_numbers = #tpu.dot_dimension_numbers<[1], [1], [0], [0], [0, 0, 1, 0], [], []>} : vector<8x8xf32>, vector<8x8xf32>, vector<8x8xf32> -> vector<8x8xf32>
    %cst_53 = arith.constant -1.000000e+09 : f32
    %87 = vector.broadcast %cst_53 : f32 to vector<8x8xf32>
    %88 = arith.select %9, %87, %86 : vector<8x8xi1>, vector<8x8xf32>
    %cst_54 = arith.constant dense<0xFF800000> : vector<8xf32>
    %89 = vector.multi_reduction <maximumf>, %88, %cst_54 [1] : vector<8x8xf32> to vector<8xf32>
    %90 = vector.shape_cast %89 : vector<8xf32> to vector<8x1xf32>
    %91 = vector.broadcast %90 : vector<8x1xf32> to vector<8x8xf32>
    %92 = arith.subf %88, %91 : vector<8x8xf32>
    %93 = math.exp %92 : vector<8x8xf32>
    %cst_55 = arith.constant dense<0.000000e+00> : vector<8xf32>
    %94 = vector.multi_reduction <add>, %93, %cst_55 [1] : vector<8x8xf32> to vector<8xf32>
    %95 = vector.shape_cast %94 : vector<8xf32> to vector<8x1xf32>
    %96 = vector.broadcast %95 : vector<8x1xf32> to vector<8x8xf32>
    %97 = arith.divf %93, %96 : vector<8x8xf32>
    %c0_56 = arith.constant 0 : index
    %c3 = arith.constant 3 : index
    %c0_57 = arith.constant 0 : index
    %c0_58 = arith.constant 0 : index
    %98 = vector.load %arg10[%c0_56, %c3, %c0_57, %c0_58] : memref<1x4x8x8xf32, #tpu.memory_space<vmem>>, vector<1x1x8x8xf32>
    %99 = vector.shape_cast %98 : vector<1x1x8x8xf32> to vector<8x8xf32>
    %100 = vector.shape_cast %97 : vector<8x8xf32> to vector<1x1x8x8xf32>
    tpu.vector_store %arg10[%c0_56, %c3, %c0_57, %c0_58], %100 {strides = array<i32>} : memref<1x4x8x8xf32, #tpu.memory_space<vmem>>, vector<1x1x8x8xf32>,
    %cst_59 = arith.constant dense<0.000000e+00> : vector<8x8xf32>
    %101 = tpu.matmul %97, %85, %cst_59 {dimension_numbers = #tpu.dot_dimension_numbers<[1], [0], [0], [1], [0, 0, 1, 1], [], []>} : vector<8x8xf32>, vector<8x8xf32>, vector<8x8xf32> -> vector<8x8xf32>
    %c24 = arith.constant 24 : index
    %c0_60 = arith.constant 0 : index
    %102 = vector.load %arg8[%c24, %c0_60] : memref<32x32xf32, #tpu.memory_space<vmem>>, vector<8x32xf32>
    %cst_61 = arith.constant dense<0.000000e+00> : vector<8x32xf32>
    %103 = tpu.matmul %101, %102, %cst_61 {dimension_numbers = #tpu.dot_dimension_numbers<[1], [0], [0], [1], [0, 0, 1, 1], [], []>} : vector<8x8xf32>, vector<8x32xf32>, vector<8x32xf32> -> vector<8x32xf32>
    %104 = arith.addf %82, %103 : vector<8x32xf32>
    %c0_62 = arith.constant 0 : index
    %c0_63 = arith.constant 0 : index
    %c0_64 = arith.constant 0 : index
    %105 = vector.load %arg9[%c0_62, %c0_63, %c0_64] : memref<1x8x32xf32, #tpu.memory_space<vmem>>, vector<1x8x32xf32>
    %106 = vector.shape_cast %105 : vector<1x8x32xf32> to vector<8x32xf32>
    %107 = vector.shape_cast %104 : vector<8x32xf32> to vector<1x8x32xf32>
    tpu.vector_store %arg9[%c0_62, %c0_63, %c0_64], %107 {strides = array<i32>} : memref<1x8x32xf32, #tpu.memory_space<vmem>>, vector<1x8x32xf32>,
    return
  }
  func.func @transform_0(%arg0: i32) -> (i32, i32, i32) {
    %c0_i32 = arith.constant 0 : i32
    %c0_i32_0 = arith.constant 0 : i32
    %c0_i32_1 = arith.constant 0 : i32
    return %arg0, %c0_i32, %c0_i32_0 : i32, i32, i32
  }
  func.func @transform_1(%arg0: i32) -> (i32, i32, i32) {
    %c0_i32 = arith.constant 0 : i32
    %c0_i32_0 = arith.constant 0 : i32
    %c0_i32_1 = arith.constant 0 : i32
    return %arg0, %c0_i32, %c0_i32_0 : i32, i32, i32
  }
  func.func @transform_2(%arg0: i32) -> (i32, i32, i32) {
    %c0_i32 = arith.constant 0 : i32
    %c0_i32_0 = arith.constant 0 : i32
    %c0_i32_1 = arith.constant 0 : i32
    return %arg0, %c0_i32, %c0_i32_0 : i32, i32, i32
  }
  func.func @transform_3(%arg0: i32) -> (i32, i32, i32) {
    %c0_i32 = arith.constant 0 : i32
    %c0_i32_0 = arith.constant 0 : i32
    %c0_i32_1 = arith.constant 0 : i32
    return %arg0, %c0_i32, %c0_i32_0 : i32, i32, i32
  }
  func.func @transform_4(%arg0: i32) -> (i32, i32) {
    %c0_i32 = arith.constant 0 : i32
    %c0_i32_0 = arith.constant 0 : i32
    %c0_i32_1 = arith.constant 0 : i32
    return %c0_i32, %c0_i32_0 : i32, i32
  }
  func.func @transform_5(%arg0: i32) -> (i32, i32) {
    %c0_i32 = arith.constant 0 : i32
    %c0_i32_0 = arith.constant 0 : i32
    %c0_i32_1 = arith.constant 0 : i32
    return %c0_i32, %c0_i32_0 : i32, i32
  }
  func.func @transform_6(%arg0: i32) -> (i32, i32) {
    %c0_i32 = arith.constant 0 : i32
    %c0_i32_0 = arith.constant 0 : i32
    %c0_i32_1 = arith.constant 0 : i32
    return %c0_i32, %c0_i32_0 : i32, i32
  }
  func.func @transform_7(%arg0: i32) -> (i32, i32) {
    %c0_i32 = arith.constant 0 : i32
    %c0_i32_0 = arith.constant 0 : i32
    %c0_i32_1 = arith.constant 0 : i32
    return %c0_i32, %c0_i32_0 : i32, i32
  }
  func.func @transform_8(%arg0: i32) -> (i32, i32, i32) {
    %c0_i32 = arith.constant 0 : i32
    %c0_i32_0 = arith.constant 0 : i32
    %c0_i32_1 = arith.constant 0 : i32
    return %arg0, %c0_i32, %c0_i32_0 : i32, i32, i32
  }
  func.func @transform_9(%arg0: i32) -> (i32, i32, i32, i32) {
    %c0_i32 = arith.constant 0 : i32
    %c0_i32_0 = arith.constant 0 : i32
    %c0_i32_1 = arith.constant 0 : i32
    %c0_i32_2 = arith.constant 0 : i32
    return %arg0, %c0_i32, %c0_i32_0, %c0_i32_1 : i32, i32, i32, i32
  }
}

</mosaic_0001>

<llo_original>
// kernel: tpu_custom_call.1
$region0: #{tpu_custom_call.1}
  #allocation0 [shape = 'u32[]', space=smem, size = 0x4, offset = 0x4, fixed_abs, tag = 'smem constant byte address 0x4 - core index']
  #allocation1 [shape = 'u32[144,128]{1,0:T(1,128)}', space=vmem, size = 0x12000, scoped, tag = 'internal scratch']
  %s0 = inlined_call_operand.hbm [shape: f32[2,8,32], index: 0, kind: input, shape index: {}]
  %s1 = inlined_call_operand.hbm [shape: f32[2,8,32], index: 1, kind: input, shape index: {}]
  %s2 = inlined_call_operand.hbm [shape: f32[2,8,32], index: 2, kind: input, shape index: {}]
  %s3 = inlined_call_operand.vmem [shape: s8[2,8,8], index: 3, kind: input, shape index: {}]
  %s4 = inlined_call_operand.hbm [shape: f32[32,32], index: 4, kind: input, shape index: {}]
  %s5 = inlined_call_operand.hbm [shape: f32[32,32], index: 5, kind: input, shape index: {}]
  %s6 = inlined_call_operand.hbm [shape: f32[32,32], index: 6, kind: input, shape index: {}]
  %s7 = inlined_call_operand.hbm [shape: f32[32,32], index: 7, kind: input, shape index: {}]
  %s8 = inlined_call_operand.hbm [shape: f32[2,8,32], index: 8, kind: output, shape index: {0}]
  %s9 = inlined_call_operand.hbm [shape: f32[2,4,8,8], index: 9, kind: output, shape index: {1}]
  %10 = xla_tuple %s8, %s9
  %s11 = sld [smem:[#allocation0]]
  $region101: #{tpu_custom_call.1} parent=0
    _
  %s13 = ssub.s32 1, %s11
  %s14 = scalar_select 0, %s13, %s11
  $region1: #{tpu_custom_call.1} parent=0
    #allocation2 [shape = 'u8[8192]{0}', space=vmem, size = 0x2000, scoped, tag = 'input window, operand 0']
    #allocation3 [shape = 's32[2]{0}', space=sflag, size = 0x8, scoped, tag = 'scoped memory for tpu_custom_call.1']
    #allocation4 [shape = 's32[2]{0}', space=sflag, size = 0x8, scoped, tag = 'scoped memory for tpu_custom_call.1']
    #allocation5 [shape = 'u8[8192]{0}', space=vmem, size = 0x2000, scoped, tag = 'input window, operand 1']
    #allocation6 [shape = 's32[2]{0}', space=sflag, size = 0x8, scoped, tag = 'scoped memory for tpu_custom_call.1']
    #allocation7 [shape = 'u8[8192]{0}', space=vmem, size = 0x2000, scoped, tag = 'input window, operand 2']
    #allocation8 [shape = 'u8[16384]{0}', space=vmem, size = 0x4000, scoped, tag = 'input window, operand 4, single buffered']
    #allocation9 [shape = 's32[1]{0}', space=sflag, size = 0x4, scoped, tag = 'scoped memory for tpu_custom_call.1']
    #allocation10 [shape = 'u8[16384]{0}', space=vmem, size = 0x4000, scoped, tag = 'input window, operand 5, single buffered']
    #allocation11 [shape = 'u8[16384]{0}', space=vmem, size = 0x4000, scoped, tag = 'input window, operand 6, single buffered']
    #allocation12 [shape = 's32[1]{0}', space=sflag, size = 0x4, scoped, tag = 'scoped memory for tpu_custom_call.1']
    #allocation13 [shape = 'u8[16384]{0}', space=vmem, size = 0x4000, scoped, tag = 'input window, operand 7, single buffered']
    #allocation14 [shape = 'u8[8192]{0}', space=vmem, size = 0x2000, scoped, tag = 'output window, operand 0']
    #allocation15 [shape = 'u8[32768]{0}', space=vmem, size = 0x8000, scoped, tag = 'output window, operand 1']
    #allocation16 [shape = 's32[2]{0}', space=sflag, size = 0x8, scoped, tag = 'scoped memory for tpu_custom_call.1']
    %15 = vsyncpa [#allocation3], 0
    %s16 = scalar_lea.sflag [#allocation3], 1
    %17 = vsyncpa %s16, 0
    %18 = vsyncpa [#allocation6], 0
    %s19 = scalar_lea.sflag [#allocation6], 1
    %20 = vsyncpa %s19, 0
    %21 = vsyncpa [#allocation9], 0
    %22 = vsyncpa [#allocation12], 0
    %23 = vsyncpa [#allocation4], 0
    %s24 = scalar_lea.sflag [#allocation4], 1
    %25 = vsyncpa %s24, 0
    %26 = vsyncpa [#allocation16], 0
    %s27 = scalar_lea.sflag [#allocation16], 1
    %28 = vsyncpa %s27, 0
    loop: start=0, step=1, limit=4
    $region2: #{tpu_custom_call.1} parent=1 // loop_pre_header
      _
    $region3: #{tpu_custom_call.1} parent=1 // loop_header
      %s30 = sphi 0, %s34
      %p31 = scmp.ge.s32.totalorder %s30, 4
      %s40 = sphi 0, %s42
      %s43 = sphi 0, %s40
      %s44 = sphi 0, %s43
      %s60 = sphi 0, %s44
      %s66 = sphi 0, %s68
      %s69 = sphi 0, %s66
      %s70 = sphi 0, %s69
      %s86 = sphi 0, %s70
      %s92 = sphi 0, %s94
      %s95 = sphi 0, %s92
      %s96 = sphi 0, %s95
      %s112 = sphi 0, %s96
      %s118 = sphi 0, %s120
      %s121 = sphi 0, %s118
      %s122 = sphi 0, %s121
      %s138 = sphi 0, %s122
      %s142 = sphi 0, %s142
      %s144 = sphi 0, %s142
      %s145 = sphi 0, %s144
      %s159 = sphi 0, %s145
      %s163 = sphi 0, %s163
      %s165 = sphi 0, %s163
      %s166 = sphi 0, %s165
      %s180 = sphi 0, %s166
      %s184 = sphi 0, %s184
      %s186 = sphi 0, %s184
      %s187 = sphi 0, %s186
      %s201 = sphi 0, %s187
      %s205 = sphi 0, %s205
      %s207 = sphi 0, %s205
      %s208 = sphi 0, %s207
      %s222 = sphi 0, %s208
      %s228 = sphi 0, %s230
      %s231 = sphi 0, %s228
      %s232 = sphi 0, %s231
      %s248 = sphi 0, %s232
      %s254 = sphi 0, %s256
      %s257 = sphi 0, %s254
      %s258 = sphi 0, %s257
      %s274 = sphi 0, %s258
    $region4: #{tpu_custom_call.1} parent=1 // loop_header_branch
      %33 = sbr.rel (%p31) target = $region8
    $region5: #{tpu_custom_call.1} parent=1 // loop_body
      %s35 = ssub.s32 %s30, 1
      %s36 = ssub.s32 %s30, 2
      %s37 = sadd.s32 %s30, 1
      %s38 = ssub.s32 %s30, %s37
      %p39 = scmp.eq.s32.totalorder %s38, 0
      %s41 = sadd.s32 %s40, 1
      %s42 = scalar_select %p39, %s40, %s41
      %p45 = pneg %p39
      %p46 = scmp.eq.s32.totalorder %s30, 1
      %p47 = por %p45, %p46
      %p48 = scmp.ne.s32.totalorder %s40, %s43
      %p49 = scmp.eq.s32.totalorder %s30, 0
      %p50 = por %p48, %p49
      %p51 = scmp.ne.s32.totalorder %s40, %s43
      %p52 = scmp.eq.s32.totalorder %s35, 1
      %p53 = por %p51, %p52
      %p54 = scmp.ne.s32.totalorder %s43, %s44
      %p55 = scmp.eq.s32.totalorder %s35, 0
      %p56 = por %p54, %p55
      %p57 = scmp.ne.s32.totalorder %s43, %s44
      %p58 = scmp.eq.s32.totalorder %s36, 1
      %p59 = por %p57, %p58
      %p61 = scmp.ne.s32.totalorder %s44, %s60
      %p62 = scmp.eq.s32.totalorder %s36, 0
      %p63 = por %p61, %p62
      %s64 = ssub.s32 %s30, %s37
      %p65 = scmp.eq.s32.totalorder %s64, 0
      %s67 = sadd.s32 %s66, 1
      %s68 = scalar_select %p65, %s66, %s67
      %p71 = pneg %p65
      %p72 = scmp.eq.s32.totalorder %s30, 1
      %p73 = por %p71, %p72
      %p74 = scmp.ne.s32.totalorder %s66, %s69
      %p75 = scmp.eq.s32.totalorder %s30, 0
      %p76 = por %p74, %p75
      %p77 = scmp.ne.s32.totalorder %s66, %s69
      %p78 = scmp.eq.s32.totalorder %s35, 1
      %p79 = por %p77, %p78
      %p80 = scmp.ne.s32.totalorder %s69, %s70
      %p81 = scmp.eq.s32.totalorder %s35, 0
      %p82 = por %p80, %p81
      %p83 = scmp.ne.s32.totalorder %s69, %s70
      %p84 = scmp.eq.s32.totalorder %s36, 1
      %p85 = por %p83, %p84
      %p87 = scmp.ne.s32.totalorder %s70, %s86
      %p88 = scmp.eq.s32.totalorder %s36, 0
      %p89 = por %p87, %p88
      %s90 = ssub.s32 %s30, %s37
      %p91 = scmp.eq.s32.totalorder %s90, 0
      %s93 = sadd.s32 %s92, 1
      %s94 = scalar_select %p91, %s92, %s93
      %p97 = pneg %p91
      %p98 = scmp.eq.s32.totalorder %s30, 1
      %p99 = por %p97, %p98
      %p100 = scmp.ne.s32.totalorder %s92, %s95
      %p101 = scmp.eq.s32.totalorder %s30, 0
      %p102 = por %p100, %p101
      %p103 = scmp.ne.s32.totalorder %s92, %s95
      %p104 = scmp.eq.s32.totalorder %s35, 1
      %p105 = por %p103, %p104
      %p106 = scmp.ne.s32.totalorder %s95, %s96
      %p107 = scmp.eq.s32.totalorder %s35, 0
      %p108 = por %p106, %p107
      %p109 = scmp.ne.s32.totalorder %s95, %s96
      %p110 = scmp.eq.s32.totalorder %s36, 1
      %p111 = por %p109, %p110
      %p113 = scmp.ne.s32.totalorder %s96, %s112
      %p114 = scmp.eq.s32.totalorder %s36, 0
      %p115 = por %p113, %p114
      %s116 = ssub.s32 %s30, %s37
      %p117 = scmp.eq.s32.totalorder %s116, 0
      %s119 = sadd.s32 %s118, 1
      %s120 = scalar_select %p117, %s118, %s119
      %p123 = pneg %p117
      %p124 = scmp.eq.s32.totalorder %s30, 1
      %p125 = por %p123, %p124
      %p126 = scmp.ne.s32.totalorder %s118, %s121
      %p127 = scmp.eq.s32.totalorder %s30, 0
      %p128 = por %p126, %p127
      %p129 = scmp.ne.s32.totalorder %s118, %s121
      %p130 = scmp.eq.s32.totalorder %s35, 1
      %p131 = por %p129, %p130
      %p132 = scmp.ne.s32.totalorder %s121, %s122
      %p133 = scmp.eq.s32.totalorder %s35, 0
      %p134 = por %p132, %p133
      %p135 = scmp.ne.s32.totalorder %s121, %s122
      %p136 = scmp.eq.s32.totalorder %s36, 1
      %p137 = por %p135, %p136
      %p139 = scmp.ne.s32.totalorder %s122, %s138
      %p140 = scmp.eq.s32.totalorder %s36, 0
      %p141 = por %p139, %p140
      %s143 = sadd.s32 %s142, 1
      %p146 = scmp.eq.s32.totalorder %s30, 1
      %p147 = scmp.ne.s32.totalorder %s142, %s144
      %p148 = scmp.eq.s32.totalorder %s30, 0
      %p149 = por %p147, %p148
      %p150 = scmp.ne.s32.totalorder %s142, %s144
      %p151 = scmp.eq.s32.totalorder %s35, 1
      %p152 = por %p150, %p151
      %p153 = scmp.ne.s32.totalorder %s144, %s145
      %p154 = scmp.eq.s32.totalorder %s35, 0
      %p155 = por %p153, %p154
      %p156 = scmp.ne.s32.totalorder %s144, %s145
      %p157 = scmp.eq.s32.totalorder %s36, 1
      %p158 = por %p156, %p157
      %p160 = scmp.ne.s32.totalorder %s145, %s159
      %p161 = scmp.eq.s32.totalorder %s36, 0
      %p162 = por %p160, %p161
      %s164 = sadd.s32 %s163, 1
      %p167 = scmp.eq.s32.totalorder %s30, 1
      %p168 = scmp.ne.s32.totalorder %s163, %s165
      %p169 = scmp.eq.s32.totalorder %s30, 0
      %p170 = por %p168, %p169
      %p171 = scmp.ne.s32.totalorder %s163, %s165
      %p172 = scmp.eq.s32.totalorder %s35, 1
      %p173 = por %p171, %p172
      %p174 = scmp.ne.s32.totalorder %s165, %s166
      %p175 = scmp.eq.s32.totalorder %s35, 0
      %p176 = por %p174, %p175
      %p177 = scmp.ne.s32.totalorder %s165, %s166
      %p178 = scmp.eq.s32.totalorder %s36, 1
      %p179 = por %p177, %p178
      %p181 = scmp.ne.s32.totalorder %s166, %s180
      %p182 = scmp.eq.s32.totalorder %s36, 0
      %p183 = por %p181, %p182
      %s185 = sadd.s32 %s184, 1
      %p188 = scmp.eq.s32.totalorder %s30, 1
      %p189 = scmp.ne.s32.totalorder %s184, %s186
      %p190 = scmp.eq.s32.totalorder %s30, 0
      %p191 = por %p189, %p190
      %p192 = scmp.ne.s32.totalorder %s184, %s186
      %p193 = scmp.eq.s32.totalorder %s35, 1
      %p194 = por %p192, %p193
      %p195 = scmp.ne.s32.totalorder %s186, %s187
      %p196 = scmp.eq.s32.totalorder %s35, 0
      %p197 = por %p195, %p196
      %p198 = scmp.ne.s32.totalorder %s186, %s187
      %p199 = scmp.eq.s32.totalorder %s36, 1
      %p200 = por %p198, %p199
      %p202 = scmp.ne.s32.totalorder %s187, %s201
      %p203 = scmp.eq.s32.totalorder %s36, 0
      %p204 = por %p202, %p203
      %s206 = sadd.s32 %s205, 1
      %p209 = scmp.eq.s32.totalorder %s30, 1
      %p210 = scmp.ne.s32.totalorder %s205, %s207
      %p211 = scmp.eq.s32.totalorder %s30, 0
      %p212 = por %p210, %p211
      %p213 = scmp.ne.s32.totalorder %s205, %s207
      %p214 = scmp.eq.s32.totalorder %s35, 1
      %p215 = por %p213, %p214
      %p216 = scmp.ne.s32.totalorder %s207, %s208
      %p217 = scmp.eq.s32.totalorder %s35, 0
      %p218 = por %p216, %p217
      %p219 = scmp.ne.s32.totalorder %s207, %s208
      %p220 = scmp.eq.s32.totalorder %s36, 1
      %p221 = por %p219, %p220
      %p223 = scmp.ne.s32.totalorder %s208, %s222
      %p224 = scmp.eq.s32.totalorder %s36, 0
      %p225 = por %p223, %p224
      %s226 = ssub.s32 %s30, %s37
      %p227 = scmp.eq.s32.totalorder %s226, 0
      %s229 = sadd.s32 %s228, 1
      %s230 = scalar_select %p227, %s228, %s229
      %p233 = pneg %p227
      %p234 = scmp.eq.s32.totalorder %s30, 1
      %p235 = por %p233, %p234
      %p236 = scmp.ne.s32.totalorder %s228, %s231
      %p237 = scmp.eq.s32.totalorder %s30, 0
      %p238 = por %p236, %p237
      %p239 = scmp.ne.s32.totalorder %s228, %s231
      %p240 = scmp.eq.s32.totalorder %s35, 1
      %p241 = por %p239, %p240
      %p242 = scmp.ne.s32.totalorder %s231, %s232
      %p243 = scmp.eq.s32.totalorder %s35, 0
      %p244 = por %p242, %p243
      %p245 = scmp.ne.s32.totalorder %s231, %s232
      %p246 = scmp.eq.s32.totalorder %s36, 1
      %p247 = por %p245, %p246
      %p249 = scmp.ne.s32.totalorder %s232, %s248
      %p250 = scmp.eq.s32.totalorder %s36, 0
      %p251 = por %p249, %p250
      %s252 = ssub.s32 %s30, %s37
      %p253 = scmp.eq.s32.totalorder %s252, 0
      %s255 = sadd.s32 %s254, 1
      %s256 = scalar_select %p253, %s254, %s255
      %p259 = pneg %p253
      %p260 = scmp.eq.s32.totalorder %s30, 1
      %p261 = por %p259, %p260
      %p262 = scmp.ne.s32.totalorder %s254, %s257
      %p263 = scmp.eq.s32.totalorder %s30, 0
      %p264 = por %p262, %p263
      %p265 = scmp.ne.s32.totalorder %s254, %s257
      %p266 = scmp.eq.s32.totalorder %s35, 1
      %p267 = por %p265, %p266
      %p268 = scmp.ne.s32.totalorder %s257, %s258
      %p269 = scmp.eq.s32.totalorder %s35, 0
      %p270 = por %p268, %p269
      %p271 = scmp.ne.s32.totalorder %s257, %s258
      %p272 = scmp.eq.s32.totalorder %s36, 1
      %p273 = por %p271, %p272
      %p275 = scmp.ne.s32.totalorder %s258, %s274
      %p276 = scmp.eq.s32.totalorder %s36, 0
      %p277 = por %p275, %p276
      %p278 = scmp.le.s32.totalorder 1, %s30
      %p279 = scmp.lt.s32.totalorder %s30, 3
      %p280 = pnand %p278, %p279
      %p281 = pneg %p280
      // Predicated region
      $region9: #{tpu_custom_call.1} parent=5 // pred_check
        _
      $region10: #{tpu_custom_call.1} parent=5 // pred_check_branch
        %283 = sbr.rel (%p280) target = $region12
      $region11: #{tpu_custom_call.1} parent=5 // pred_region
        %s284 = ssub.s32 %s30, 1
        // Predicated region
        $region13: #{tpu_custom_call.1} parent=11 // pred_check
          %p285 = pneg %p155
        $region14: #{tpu_custom_call.1} parent=11 // pred_check_branch
          %287 = sbr.rel (%p285) target = $region16
        $region15: #{tpu_custom_call.1} parent=11 // pred_region
          %s289 = ssub.s32 512, 512
          %290 = vsyncadd [#allocation9], %s289
          %s291 = sshll.u32 [#allocation8], 4
          %s292 = int_to_ptr.vmem [resolvable:$true] %s291
          %297 = dma.hbm_to_vmem [thread:$0]  %s4, 512, %s292, [#allocation9], 128, 128, 8
        $region16: #{tpu_custom_call.1} parent=11 // pred_fallthru
          _
        // Predicated region
        $region17: #{tpu_custom_call.1} parent=11 // pred_check
          %p298 = pneg %p176
        $region18: #{tpu_custom_call.1} parent=11 // pred_check_branch
          %300 = sbr.rel (%p298) target = $region20
        $region19: #{tpu_custom_call.1} parent=11 // pred_region
          %s302 = ssub.s32 512, 512
          %303 = vsyncadd [#allocation9], %s302
          %s304 = sshll.u32 [#allocation10], 4
          %s305 = int_to_ptr.vmem [resolvable:$true] %s304
          %310 = dma.hbm_to_vmem [thread:$0]  %s5, 512, %s305, [#allocation9], 128, 128, 8
        $region20: #{tpu_custom_call.1} parent=11 // pred_fallthru
          _
        // Predicated region
        $region21: #{tpu_custom_call.1} parent=11 // pred_check
          %p311 = pneg %p197
        $region22: #{tpu_custom_call.1} parent=11 // pred_check_branch
          %313 = sbr.rel (%p311) target = $region24
        $region23: #{tpu_custom_call.1} parent=11 // pred_region
          %s315 = ssub.s32 512, 512
          %316 = vsyncadd [#allocation12], %s315
          %s317 = sshll.u32 [#allocation11], 4
          %s318 = int_to_ptr.vmem [resolvable:$true] %s317
          %323 = dma.hbm_to_vmem [thread:$0]  %s6, 512, %s318, [#allocation12], 128, 128, 8
        $region24: #{tpu_custom_call.1} parent=11 // pred_fallthru
          _
        // Predicated region
        $region25: #{tpu_custom_call.1} parent=11 // pred_check
          %p324 = pneg %p218
        $region26: #{tpu_custom_call.1} parent=11 // pred_check_branch
          %326 = sbr.rel (%p324) target = $region28
        $region27: #{tpu_custom_call.1} parent=11 // pred_region
          %s328 = ssub.s32 512, 512
          %329 = vsyncadd [#allocation12], %s328
          %s330 = sshll.u32 [#allocation13], 4
          %s331 = int_to_ptr.vmem [resolvable:$true] %s330
          %336 = dma.hbm_to_vmem [thread:$0]  %s7, 512, %s331, [#allocation12], 128, 128, 8
        $region28: #{tpu_custom_call.1} parent=11 // pred_fallthru
          _
      $region12: #{tpu_custom_call.1} parent=5 // pred_fallthru
        _
      %p337 = scmp.lt.s32.totalorder %s30, 2
      // Predicated region
      $region29: #{tpu_custom_call.1} parent=5 // pred_check
        %p338 = pneg %p337
      $region30: #{tpu_custom_call.1} parent=5 // pred_check_branch
        %340 = sbr.rel (%p338) target = $region32
      $region31: #{tpu_custom_call.1} parent=5 // pred_region
        // Predicated region
        $region33: #{tpu_custom_call.1} parent=31 // pred_check
          %p341 = pneg %p50
        $region34: #{tpu_custom_call.1} parent=31 // pred_check_branch
          %343 = sbr.rel (%p341) target = $region36
        $region35: #{tpu_custom_call.1} parent=31 // pred_region
          %s344 = sand.u32 %s40, 1
          %s345 = scalar_lea.sflag [#allocation3], %s344
          %s346 = sand.u32 %s40, 1
          %s347 = smul.addr %s346, 8
          %s348 = scalar_lea.vmem [#allocation2], %s347
          %s350 = ssub.s32 128, 128
          %351 = vsyncadd %s345, %s350
          %s352 = smul.addr %s30, 128
          %s353 = scalar_lea.hbm %s0, %s352
          %s355 = sshll.u32 %s348, 4
          %s356 = int_to_ptr.vmem [resolvable:$true] %s355
          %358 = dma.hbm_to_vmem [thread:$0]  %s353, 128, %s356, %s345
        $region36: #{tpu_custom_call.1} parent=31 // pred_fallthru
          _
        // Predicated region
        $region37: #{tpu_custom_call.1} parent=31 // pred_check
          %p359 = pneg %p76
        $region38: #{tpu_custom_call.1} parent=31 // pred_check_branch
          %361 = sbr.rel (%p359) target = $region40
        $region39: #{tpu_custom_call.1} parent=31 // pred_region
          %s362 = sand.u32 %s30, 1
          %s363 = scalar_lea.sflag [#allocation6], %s362
          %s364 = sand.u32 %s66, 1
          %s365 = smul.addr %s364, 8
          %s366 = scalar_lea.vmem [#allocation5], %s365
          %s368 = ssub.s32 128, 128
          %369 = vsyncadd %s363, %s368
          %s370 = smul.addr %s30, 128
          %s371 = scalar_lea.hbm %s1, %s370
          %s373 = sshll.u32 %s366, 4
          %s374 = int_to_ptr.vmem [resolvable:$true] %s373
          %376 = dma.hbm_to_vmem [thread:$0]  %s371, 128, %s374, %s363
        $region40: #{tpu_custom_call.1} parent=31 // pred_fallthru
          _
        // Predicated region
        $region41: #{tpu_custom_call.1} parent=31 // pred_check
          %p377 = pneg %p102
        $region42: #{tpu_custom_call.1} parent=31 // pred_check_branch
          %379 = sbr.rel (%p377) target = $region44
        $region43: #{tpu_custom_call.1} parent=31 // pred_region
          %s380 = sand.u32 %s30, 1
          %s381 = scalar_lea.sflag [#allocation6], %s380
          %s382 = sand.u32 %s92, 1
          %s383 = smul.addr %s382, 8
          %s384 = scalar_lea.vmem [#allocation7], %s383
          %s386 = ssub.s32 128, 128
          %387 = vsyncadd %s381, %s386
          %s388 = smul.addr %s30, 128
          %s389 = scalar_lea.hbm %s2, %s388
          %s391 = sshll.u32 %s384, 4
          %s392 = int_to_ptr.vmem [resolvable:$true] %s391
          %394 = dma.hbm_to_vmem [thread:$0]  %s389, 128, %s392, %s381
        $region44: #{tpu_custom_call.1} parent=31 // pred_fallthru
          _
        // Predicated region
        $region45: #{tpu_custom_call.1} parent=31 // pred_check
          %p395 = pneg %p128
        $region46: #{tpu_custom_call.1} parent=31 // pred_check_branch
          %397 = sbr.rel (%p395) target = $region48
        $region47: #{tpu_custom_call.1} parent=31 // pred_region
          %p398 = scmp.lt.s32.totalorder %s30, 1
          %s399 = scalar_select %p398, %s30, 1
          %s400 = smul.addr %s399, 2
          %s401 = scalar_lea.vmem %s3, %s400
        $region48: #{tpu_custom_call.1} parent=31 // pred_fallthru
          _
      $region32: #{tpu_custom_call.1} parent=5 // pred_fallthru
        _
      %p402 = scmp.le.s32.totalorder 1, %s30
      %p403 = scmp.lt.s32.totalorder %s30, 3
      %p404 = pnand %p402, %p403
      %p405 = pneg %p404
      // Predicated region
      $region49: #{tpu_custom_call.1} parent=5 // pred_check
        _
      $region50: #{tpu_custom_call.1} parent=5 // pred_check_branch
        %407 = sbr.rel (%p404) target = $region52
      $region51: #{tpu_custom_call.1} parent=5 // pred_region
        %s408 = ssub.s32 %s30, 1
        %s409 = sand.u32 %s43, 1
        %s410 = scalar_lea.sflag [#allocation3], %s409
        %s411 = sand.u32 %s43, 1
        %s412 = smul.addr %s411, 8
        %s413 = scalar_lea.vmem [#allocation2], %s412
        // Predicated region
        $region53: #{tpu_custom_call.1} parent=51 // pred_check
          %p414 = pneg %p56
        $region54: #{tpu_custom_call.1} parent=51 // pred_check_branch
          %416 = sbr.rel (%p414) target = $region56
        $region55: #{tpu_custom_call.1} parent=51 // pred_region
          %417 = dma.done %s410, 128
        $region56: #{tpu_custom_call.1} parent=51 // pred_fallthru
          _
        %s418 = sand.u32 %s35, 1
        %s419 = scalar_lea.sflag [#allocation6], %s418
        %s420 = sand.u32 %s69, 1
        %s421 = smul.addr %s420, 8
        %s422 = scalar_lea.vmem [#allocation5], %s421
        // Predicated region
        $region57: #{tpu_custom_call.1} parent=51 // pred_check
          %p423 = pneg %p82
        $region58: #{tpu_custom_call.1} parent=51 // pred_check_branch
          %425 = sbr.rel (%p423) target = $region60
        $region59: #{tpu_custom_call.1} parent=51 // pred_region
          %426 = dma.done %s419, 128
        $region60: #{tpu_custom_call.1} parent=51 // pred_fallthru
          _
        %s427 = sand.u32 %s35, 1
        %s428 = scalar_lea.sflag [#allocation6], %s427
        %s429 = sand.u32 %s95, 1
        %s430 = smul.addr %s429, 8
        %s431 = scalar_lea.vmem [#allocation7], %s430
        // Predicated region
        $region61: #{tpu_custom_call.1} parent=51 // pred_check
          %p432 = pneg %p108
        $region62: #{tpu_custom_call.1} parent=51 // pred_check_branch
          %434 = sbr.rel (%p432) target = $region64
        $region63: #{tpu_custom_call.1} parent=51 // pred_region
          %435 = dma.done %s428, 128
        $region64: #{tpu_custom_call.1} parent=51 // pred_fallthru
          _
        // Predicated region
        $region65: #{tpu_custom_call.1} parent=51 // pred_check
          %p436 = pneg %p155
        $region66: #{tpu_custom_call.1} parent=51 // pred_check_branch
          %438 = sbr.rel (%p436) target = $region68
        $region67: #{tpu_custom_call.1} parent=51 // pred_region
          %439 = dma.done [#allocation9], 512
        $region68: #{tpu_custom_call.1} parent=51 // pred_fallthru
          _
        // Predicated region
        $region69: #{tpu_custom_call.1} parent=51 // pred_check
          %p440 = pneg %p176
        $region70: #{tpu_custom_call.1} parent=51 // pred_check_branch
          %442 = sbr.rel (%p440) target = $region72
        $region71: #{tpu_custom_call.1} parent=51 // pred_region
          %443 = dma.done [#allocation9], 512
        $region72: #{tpu_custom_call.1} parent=51 // pred_fallthru
          _
        // Predicated region
        $region73: #{tpu_custom_call.1} parent=51 // pred_check
          %p444 = pneg %p197
        $region74: #{tpu_custom_call.1} parent=51 // pred_check_branch
          %446 = sbr.rel (%p444) target = $region76
        $region75: #{tpu_custom_call.1} parent=51 // pred_region
          %447 = dma.done [#allocation12], 512
        $region76: #{tpu_custom_call.1} parent=51 // pred_fallthru
          _
        // Predicated region
        $region77: #{tpu_custom_call.1} parent=51 // pred_check
          %p448 = pneg %p218
        $region78: #{tpu_custom_call.1} parent=51 // pred_check_branch
          %450 = sbr.rel (%p448) target = $region80
        $region79: #{tpu_custom_call.1} parent=51 // pred_region
          %451 = dma.done [#allocation12], 512
        $region80: #{tpu_custom_call.1} parent=51 // pred_fallthru
          _
        %s452 = sand.u32 %s43, 1
        %s453 = scalar_lea.sflag [#allocation3], %s452
        %s454 = sand.u32 %s43, 1
        %s455 = smul.addr %s454, 8
        %s456 = scalar_lea.vmem [#allocation2], %s455
        %p457 = pneg %p56
        %p458 = pneg %p53
        %s459 = sand.u32 %s35, 1
        %s460 = scalar_lea.sflag [#allocation6], %s459
        %s461 = sand.u32 %s69, 1
        %s462 = smul.addr %s461, 8
        %s463 = scalar_lea.vmem [#allocation5], %s462
        %p464 = pneg %p82
        %p465 = pneg %p79
        %s466 = sand.u32 %s35, 1
        %s467 = scalar_lea.sflag [#allocation6], %s466
        %s468 = sand.u32 %s95, 1
        %s469 = smul.addr %s468, 8
        %s470 = scalar_lea.vmem [#allocation7], %s469
        %p471 = pneg %p108
        %p472 = pneg %p105
        %p473 = scmp.lt.s32.totalorder %s35, 1
        %s474 = scalar_select %p473, %s35, 1
        %s475 = smul.addr %s474, 2
        %s476 = scalar_lea.vmem %s3, %s475
        %p477 = pneg %p134
        %p478 = pneg %p131
        %p479 = pneg %p155
        %p480 = pneg %p152
        %p481 = pneg %p176
        %p482 = pneg %p173
        %p483 = pneg %p197
        %p484 = pneg %p194
        %p485 = pneg %p218
        %p486 = pneg %p215
        %p487 = pneg %p244
        %p488 = pneg %p241
        %s489 = sand.u32 %s231, 1
        %s490 = scalar_lea.sflag [#allocation4], %s489
        %s491 = sand.u32 %s231, 1
        %s492 = smul.addr %s491, 8
        %s493 = scalar_lea.vmem [#allocation14], %s492
        %p494 = pneg %p270
        %p495 = pneg %p267
        %s496 = sand.u32 %s257, 1
        %s497 = scalar_lea.sflag [#allocation16], %s496
        %s498 = sand.u32 %s257, 1
        %s499 = smul.addr %s498, 32
        %s500 = scalar_lea.vmem [#allocation15], %s499
        %p501 = scmp.lt.s32.totalorder %s35, 1
        %s502 = scalar_select %p501, %s35, 1
        %s503 = smul.addr %s502, 2
        %s504 = scalar_lea.vmem %s3, %s503
        %v507 = vld [vmem:[%s413] sm:$0xff]
        %v508 = vld [vmem:[%s422] sm:$0xff]
        %v509 = vld [vmem:[%s431] sm:$0xff]
        %v510 = vld [vmem:[%s504] sm:$0x3]
        %vm511 = vnez %v510
        %v512 = vld [vmem:[#allocation8] sm:$0xff]
        %v513 = vld [vmem:[#allocation8 + $0x8] sm:$0xff]
        %v514 = vld [vmem:[#allocation8 + $0x10] sm:$0xff]
        %v515 = vld [vmem:[#allocation8 + $0x18] sm:$0xff]
        %vm516 = vcmask 261120
        %v518 = vsel %vm516, %v507, 0
        %520 = vmatprep.subr.mxu0 0.0
        %521 = vmatpush1.msra.mxu0 %v512
        %522 = vmatprep.subr.mxu0 0.0
        %523 = vmatpush1.msra.mxu0 %v513
        %524 = vmatprep.subr.mxu0 0.0
        %525 = vmatpush1.msra.mxu0 %v514
        %526 = vmatprep.subr.mxu0 0.0
        %527 = vmatpush1.msra.mxu0 %v515
        %528 = vmatprep.subr.mxu0 0.0
        %529 = vmatpush1.msra.mxu0 0.0
        %530 = vmatprep.subr.mxu0 0.0
        %531 = vmatpush1.msra.mxu0 0.0
        %532 = vmatprep.subr.mxu0 0.0
        %533 = vmatpush1.msra.mxu0 0.0
        %534 = vmatprep.subr.mxu0 0.0
        %535 = vmatpush1.msra.mxu0 0.0
        %536 = vmatprep.subr.mxu0 0.0
        %537 = vmatpush1.msra.mxu0 0.0
        %538 = vmatprep.subr.mxu0 0.0
        %539 = vmatpush1.msra.mxu0 0.0
        %540 = vmatprep.subr.mxu0 0.0
        %541 = vmatpush1.msra.mxu0 0.0
        %542 = vmatprep.subr.mxu0 0.0
        %543 = vmatpush1.msra.mxu0 0.0
        %544 = vmatprep.subr.mxu0 0.0
        %545 = vmatpush1.msra.mxu0 0.0
        %546 = vmatprep.subr.mxu0 0.0
        %547 = vmatpush1.msra.mxu0 0.0
        %548 = vmatprep.subr.mxu0 0.0
        %549 = vmatpush1.msra.mxu0 0.0
        %550 = vmatprep.subr.mxu0 0.0
        %551 = vmatpush1.msra.mxu0 0.0
        %552 = vmatprep.subr.mxu0 0.0
        %553 = vmatpush1.msra.mxu0 0.0
        %554 = vmatprep.subr.mxu0 0.0
        %555 = vmatpush1.msra.mxu0 0.0
        %556 = vmatprep.subr.mxu0 0.0
        %557 = vmatpush1.msra.mxu0 0.0
        %558 = vmatprep.subr.mxu0 0.0
        %559 = vmatpush1.msra.mxu0 0.0
        %560 = vmatprep.subr.mxu0 0.0
        %561 = vmatpush1.msra.mxu0 0.0
        %562 = vmatprep.subr.mxu0 0.0
        %563 = vmatpush1.msra.mxu0 0.0
        %564 = vmatprep.subr.mxu0 0.0
        %565 = vmatpush1.msra.mxu0 0.0
        %566 = vmatprep.subr.mxu0 0.0
        %567 = vmatpush1.msra.mxu0 0.0
        %568 = vmatprep.subr.mxu0 0.0
        %569 = vmatpush1.msra.mxu0 0.0
        %570 = vmatprep.subr.mxu0 0.0
        %571 = vmatpush1.msra.mxu0 0.0
        %572 = vmatprep.subr.mxu0 0.0
        %573 = vmatpush1.msra.mxu0 0.0
        %574 = vmatprep.subr.mxu0 0.0
        %575 = vmatpush1.msra.mxu0 0.0
        %576 = vmatprep.subr.mxu0 0.0
        %577 = vmatpush1.msra.mxu0 0.0
        %578 = vmatprep.subr.mxu0 0.0
        %579 = vmatpush1.msra.mxu0 0.0
        %580 = vmatprep.subr.mxu0 0.0
        %581 = vmatpush1.msra.mxu0 0.0
        %582 = vmatprep.subr.mxu0 0.0
        %583 = vmatpush1.msra.mxu0 0.0
        %584 = vmatprep.mubr.f32.mxu0 0.0
        %585 = vmatmul.mubr.f32.gmra.mrb[0].mxu0 %v518
        %v586 = vpop.f32.mrb[0].mxu0
        %v587 = vadd.f32 0.0, %v586
        %v588 = vpop.f32.mrb[0].mxu0
        %589 = vdwg.mxu0
        %v590 = vld [vmem:[#allocation10] sm:$0xff]
        %v591 = vld [vmem:[#allocation10 + $0x8] sm:$0xff]
        %v592 = vld [vmem:[#allocation10 + $0x10] sm:$0xff]
        %v593 = vld [vmem:[#allocation10 + $0x18] sm:$0xff]
        %v595 = vsel %vm516, %v508, 0
        %597 = vmatprep.subr.mxu0 0.0
        %598 = vmatpush1.msra.mxu0 %v590
        %599 = vmatprep.subr.mxu0 0.0
        %600 = vmatpush1.msra.mxu0 %v591
        %601 = vmatprep.subr.mxu0 0.0
        %602 = vmatpush1.msra.mxu0 %v592
        %603 = vmatprep.subr.mxu0 0.0
        %604 = vmatpush1.msra.mxu0 %v593
        %605 = vmatprep.subr.mxu0 0.0
        %606 = vmatpush1.msra.mxu0 0.0
        %607 = vmatprep.subr.mxu0 0.0
        %608 = vmatpush1.msra.mxu0 0.0
        %609 = vmatprep.subr.mxu0 0.0
        %610 = vmatpush1.msra.mxu0 0.0
        %611 = vmatprep.subr.mxu0 0.0
        %612 = vmatpush1.msra.mxu0 0.0
        %613 = vmatprep.subr.mxu0 0.0
        %614 = vmatpush1.msra.mxu0 0.0
        %615 = vmatprep.subr.mxu0 0.0
        %616 = vmatpush1.msra.mxu0 0.0
        %617 = vmatprep.subr.mxu0 0.0
        %618 = vmatpush1.msra.mxu0 0.0
        %619 = vmatprep.subr.mxu0 0.0
        %620 = vmatpush1.msra.mxu0 0.0
        %621 = vmatprep.subr.mxu0 0.0
        %622 = vmatpush1.msra.mxu0 0.0
        %623 = vmatprep.subr.mxu0 0.0
        %624 = vmatpush1.msra.mxu0 0.0
        %625 = vmatprep.subr.mxu0 0.0
        %626 = vmatpush1.msra.mxu0 0.0
        %627 = vmatprep.subr.mxu0 0.0
        %628 = vmatpush1.msra.mxu0 0.0
        %629 = vmatprep.subr.mxu0 0.0
        %630 = vmatpush1.msra.mxu0 0.0
        %631 = vmatprep.subr.mxu0 0.0
        %632 = vmatpush1.msra.mxu0 0.0
        %633 = vmatprep.subr.mxu0 0.0
        %634 = vmatpush1.msra.mxu0 0.0
        %635 = vmatprep.subr.mxu0 0.0
        %636 = vmatpush1.msra.mxu0 0.0
        %637 = vmatprep.subr.mxu0 0.0
        %638 = vmatpush1.msra.mxu0 0.0
        %639 = vmatprep.subr.mxu0 0.0
        %640 = vmatpush1.msra.mxu0 0.0
        %641 = vmatprep.subr.mxu0 0.0
        %642 = vmatpush1.msra.mxu0 0.0
        %643 = vmatprep.subr.mxu0 0.0
        %644 = vmatpush1.msra.mxu0 0.0
        %645 = vmatprep.subr.mxu0 0.0
        %646 = vmatpush1.msra.mxu0 0.0
        %647 = vmatprep.subr.mxu0 0.0
        %648 = vmatpush1.msra.mxu0 0.0
        %649 = vmatprep.subr.mxu0 0.0
        %650 = vmatpush1.msra.mxu0 0.0
        %651 = vmatprep.subr.mxu0 0.0
        %652 = vmatpush1.msra.mxu0 0.0
        %653 = vmatprep.subr.mxu0 0.0
        %654 = vmatpush1.msra.mxu0 0.0
        %655 = vmatprep.subr.mxu0 0.0
        %656 = vmatpush1.msra.mxu0 0.0
        %657 = vmatprep.subr.mxu0 0.0
        %658 = vmatpush1.msra.mxu0 0.0
        %659 = vmatprep.subr.mxu0 0.0
        %660 = vmatpush1.msra.mxu0 0.0
        %661 = vmatprep.mubr.f32.mxu0 0.0
        %662 = vmatmul.mubr.f32.gmra.mrb[0].mxu0 %v595
        %v663 = vpop.f32.mrb[0].mxu0
        %v664 = vadd.f32 0.0, %v663
        %v665 = vpop.f32.mrb[0].mxu0
        %666 = vdwg.mxu0
        %v667 = vld [vmem:[#allocation11] sm:$0xff]
        %v668 = vld [vmem:[#allocation11 + $0x8] sm:$0xff]
        %v669 = vld [vmem:[#allocation11 + $0x10] sm:$0xff]
        %v670 = vld [vmem:[#allocation11 + $0x18] sm:$0xff]
        %v672 = vsel %vm516, %v509, 0
        %674 = vmatprep.subr.mxu0 0.0
        %675 = vmatpush1.msra.mxu0 %v667
        %676 = vmatprep.subr.mxu0 0.0
        %677 = vmatpush1.msra.mxu0 %v668
        %678 = vmatprep.subr.mxu0 0.0
        %679 = vmatpush1.msra.mxu0 %v669
        %680 = vmatprep.subr.mxu0 0.0
        %681 = vmatpush1.msra.mxu0 %v670
        %682 = vmatprep.subr.mxu0 0.0
        %683 = vmatpush1.msra.mxu0 0.0
        %684 = vmatprep.subr.mxu0 0.0
        %685 = vmatpush1.msra.mxu0 0.0
        %686 = vmatprep.subr.mxu0 0.0
        %687 = vmatpush1.msra.mxu0 0.0
        %688 = vmatprep.subr.mxu0 0.0
        %689 = vmatpush1.msra.mxu0 0.0
        %690 = vmatprep.subr.mxu0 0.0
        %691 = vmatpush1.msra.mxu0 0.0
        %692 = vmatprep.subr.mxu0 0.0
        %693 = vmatpush1.msra.mxu0 0.0
        %694 = vmatprep.subr.mxu0 0.0
        %695 = vmatpush1.msra.mxu0 0.0
        %696 = vmatprep.subr.mxu0 0.0
        %697 = vmatpush1.msra.mxu0 0.0
        %698 = vmatprep.subr.mxu0 0.0
        %699 = vmatpush1.msra.mxu0 0.0
        %700 = vmatprep.subr.mxu0 0.0
        %701 = vmatpush1.msra.mxu0 0.0
        %702 = vmatprep.subr.mxu0 0.0
        %703 = vmatpush1.msra.mxu0 0.0
        %704 = vmatprep.subr.mxu0 0.0
        %705 = vmatpush1.msra.mxu0 0.0
        %706 = vmatprep.subr.mxu0 0.0
        %707 = vmatpush1.msra.mxu0 0.0
        %708 = vmatprep.subr.mxu0 0.0
        %709 = vmatpush1.msra.mxu0 0.0
        %710 = vmatprep.subr.mxu0 0.0
        %711 = vmatpush1.msra.mxu0 0.0
        %712 = vmatprep.subr.mxu0 0.0
        %713 = vmatpush1.msra.mxu0 0.0
        %714 = vmatprep.subr.mxu0 0.0
        %715 = vmatpush1.msra.mxu0 0.0
        %716 = vmatprep.subr.mxu0 0.0
        %717 = vmatpush1.msra.mxu0 0.0
        %718 = vmatprep.subr.mxu0 0.0
        %719 = vmatpush1.msra.mxu0 0.0
        %720 = vmatprep.subr.mxu0 0.0
        %721 = vmatpush1.msra.mxu0 0.0
        %722 = vmatprep.subr.mxu0 0.0
        %723 = vmatpush1.msra.mxu0 0.0
        %724 = vmatprep.subr.mxu0 0.0
        %725 = vmatpush1.msra.mxu0 0.0
        %726 = vmatprep.subr.mxu0 0.0
        %727 = vmatpush1.msra.mxu0 0.0
        %728 = vmatprep.subr.mxu0 0.0
        %729 = vmatpush1.msra.mxu0 0.0
        %730 = vmatprep.subr.mxu0 0.0
        %731 = vmatpush1.msra.mxu0 0.0
        %732 = vmatprep.subr.mxu0 0.0
        %733 = vmatpush1.msra.mxu0 0.0
        %734 = vmatprep.subr.mxu0 0.0
        %735 = vmatpush1.msra.mxu0 0.0
        %736 = vmatprep.subr.mxu0 0.0
        %737 = vmatpush1.msra.mxu0 0.0
        %738 = vmatprep.mubr.f32.mxu0 0.0
        %739 = vmatmul.mubr.f32.gmra.mrb[0].mxu0 %v672
        %v740 = vpop.f32.mrb[0].mxu0
        %v741 = vadd.f32 0.0, %v740
        %v742 = vpop.f32.mrb[0].mxu0
        %743 = vdwg.mxu0
        %vm744 = vcmask 64512
        %v746 = vsel %vm744, %v587, 0
        %v749 = vsel %vm744, %v664, 0
        %751 = vmatprep.subr.mxu0 0.0
        %752 = vmatpush1.xpose.msra.mxu0 %v749
        %753 = vmatprep.subr.mxu0 0.0
        %754 = vmatpush1.xpose.msra.mxu0 0.0
        %755 = vmatprep.subr.mxu0 0.0
        %756 = vmatpush1.xpose.msra.mxu0 0.0
        %757 = vmatprep.subr.mxu0 0.0
        %758 = vmatpush1.xpose.msra.mxu0 0.0
        %759 = vmatprep.subr.mxu0 0.0
        %760 = vmatpush1.xpose.msra.mxu0 0.0
        %761 = vmatprep.subr.mxu0 0.0
        %762 = vmatpush1.xpose.msra.mxu0 0.0
        %763 = vmatprep.subr.mxu0 0.0
        %764 = vmatpush1.xpose.msra.mxu0 0.0
        %765 = vmatprep.subr.mxu0 0.0
        %766 = vmatpush1.xpose.msra.mxu0 0.0
        %767 = vmatprep.subr.mxu0 0.0
        %768 = vmatpush1.xpose.msra.mxu0 0.0
        %769 = vmatprep.subr.mxu0 0.0
        %770 = vmatpush1.xpose.msra.mxu0 0.0
        %771 = vmatprep.subr.mxu0 0.0
        %772 = vmatpush1.xpose.msra.mxu0 0.0
        %773 = vmatprep.subr.mxu0 0.0
        %774 = vmatpush1.xpose.msra.mxu0 0.0
        %775 = vmatprep.subr.mxu0 0.0
        %776 = vmatpush1.xpose.msra.mxu0 0.0
        %777 = vmatprep.subr.mxu0 0.0
        %778 = vmatpush1.xpose.msra.mxu0 0.0
        %779 = vmatprep.subr.mxu0 0.0
        %780 = vmatpush1.xpose.msra.mxu0 0.0
        %781 = vmatprep.subr.mxu0 0.0
        %782 = vmatpush1.xpose.msra.mxu0 0.0
        %783 = vmatprep.subr.mxu0 0.0
        %784 = vmatpush1.xpose.msra.mxu0 0.0
        %785 = vmatprep.subr.mxu0 0.0
        %786 = vmatpush1.xpose.msra.mxu0 0.0
        %787 = vmatprep.subr.mxu0 0.0
        %788 = vmatpush1.xpose.msra.mxu0 0.0
        %789 = vmatprep.subr.mxu0 0.0
        %790 = vmatpush1.xpose.msra.mxu0 0.0
        %791 = vmatprep.subr.mxu0 0.0
        %792 = vmatpush1.xpose.msra.mxu0 0.0
        %793 = vmatprep.subr.mxu0 0.0
        %794 = vmatpush1.xpose.msra.mxu0 0.0
        %795 = vmatprep.subr.mxu0 0.0
        %796 = vmatpush1.xpose.msra.mxu0 0.0
        %797 = vmatprep.subr.mxu0 0.0
        %798 = vmatpush1.xpose.msra.mxu0 0.0
        %799 = vmatprep.subr.mxu0 0.0
        %800 = vmatpush1.xpose.msra.mxu0 0.0
        %801 = vmatprep.subr.mxu0 0.0
        %802 = vmatpush1.xpose.msra.mxu0 0.0
        %803 = vmatprep.subr.mxu0 0.0
        %804 = vmatpush1.xpose.msra.mxu0 0.0
        %805 = vmatprep.subr.mxu0 0.0
        %806 = vmatpush1.xpose.msra.mxu0 0.0
        %807 = vmatprep.subr.mxu0 0.0
        %808 = vmatpush1.xpose.msra.mxu0 0.0
        %809 = vmatprep.subr.mxu0 0.0
        %810 = vmatpush1.xpose.msra.mxu0 0.0
        %811 = vmatprep.subr.mxu0 0.0
        %812 = vmatpush1.xpose.msra.mxu0 0.0
        %813 = vmatprep.subr.mxu0 0.0
        %814 = vmatpush1.xpose.msra.mxu0 0.0
        %815 = vmatprep.mubr.f32.mxu0 0.0
        %816 = vmatmul.mubr.f32.gmra.mrb[0].mxu0 %v746
        %v817 = vpop.f32.mrb[0].mxu0
        %v818 = vadd.f32 0.0, %v817
        %v819 = vpop.f32.mrb[0].mxu0
        %820 = vdwg.mxu0
        %v821 = vsel %vm511, 16843009, 0
        %v822 = vunpack.c.0.s8 %v821
        %vm823 = vcmp.ne.s32.totalorder %v822, 0
        %v824 = vsel %vm823, -1e+09, %v818
        %v825 = vsel %vm744, %v824, -inf
        %826 = vmax.xlane.f32.xlu0 %v825
        %v827 = vpop.xlane.xlu0 %826
        %v828 = vsub.f32 %v824, %v827
        %v829 = vmul.f32 %v828, 1.442695
        %v830 = vpow.pop %v829
        %v831 = vsel %vm744, %v830, 0.0
        %832 = vadd.xlane.f32.xlu0 %v831
        %v833 = vpop.xlane.xlu0 %832
        %v834 = vrcp.pop %v833
        %v835 = vmul.f32 %v830, %v834
        %836 = vst.msk [vmem:[%s500] sm:$0xff] %vm744, %v835
        %v838 = vsel %vm744, %v835, 0
        %840 = vmatprep.subr.mxu0 0.0
        %841 = vmatpush1.msra.mxu0 %v741
        %842 = vmatprep.subr.mxu0 0.0
        %843 = vmatpush1.msra.mxu0 0.0
        %844 = vmatprep.subr.mxu0 0.0
        %845 = vmatpush1.msra.mxu0 0.0
        %846 = vmatprep.subr.mxu0 0.0
        %847 = vmatpush1.msra.mxu0 0.0
        %848 = vmatprep.subr.mxu0 0.0
        %849 = vmatpush1.msra.mxu0 0.0
        %850 = vmatprep.subr.mxu0 0.0
        %851 = vmatpush1.msra.mxu0 0.0
        %852 = vmatprep.subr.mxu0 0.0
        %853 = vmatpush1.msra.mxu0 0.0
        %854 = vmatprep.subr.mxu0 0.0
        %855 = vmatpush1.msra.mxu0 0.0
        %856 = vmatprep.subr.mxu0 0.0
        %857 = vmatpush1.msra.mxu0 0.0
        %858 = vmatprep.subr.mxu0 0.0
        %859 = vmatpush1.msra.mxu0 0.0
        %860 = vmatprep.subr.mxu0 0.0
        %861 = vmatpush1.msra.mxu0 0.0
        %862 = vmatprep.subr.mxu0 0.0
        %863 = vmatpush1.msra.mxu0 0.0
        %864 = vmatprep.subr.mxu0 0.0
        %865 = vmatpush1.msra.mxu0 0.0
        %866 = vmatprep.subr.mxu0 0.0
        %867 = vmatpush1.msra.mxu0 0.0
        %868 = vmatprep.subr.mxu0 0.0
        %869 = vmatpush1.msra.mxu0 0.0
        %870 = vmatprep.subr.mxu0 0.0
        %871 = vmatpush1.msra.mxu0 0.0
        %872 = vmatprep.subr.mxu0 0.0
        %873 = vmatpush1.msra.mxu0 0.0
        %874 = vmatprep.subr.mxu0 0.0
        %875 = vmatpush1.msra.mxu0 0.0
        %876 = vmatprep.subr.mxu0 0.0
        %877 = vmatpush1.msra.mxu0 0.0
        %878 = vmatprep.subr.mxu0 0.0
        %879 = vmatpush1.msra.mxu0 0.0
        %880 = vmatprep.subr.mxu0 0.0
        %881 = vmatpush1.msra.mxu0 0.0
        %882 = vmatprep.subr.mxu0 0.0
        %883 = vmatpush1.msra.mxu0 0.0
        %884 = vmatprep.subr.mxu0 0.0
        %885 = vmatpush1.msra.mxu0 0.0
        %886 = vmatprep.subr.mxu0 0.0
        %887 = vmatpush1.msra.mxu0 0.0
        %888 = vmatprep.subr.mxu0 0.0
        %889 = vmatpush1.msra.mxu0 0.0
        %890 = vmatprep.subr.mxu0 0.0
        %891 = vmatpush1.msra.mxu0 0.0
        %892 = vmatprep.subr.mxu0 0.0
        %893 = vmatpush1.msra.mxu0 0.0
        %894 = vmatprep.subr.mxu0 0.0
        %895 = vmatpush1.msra.mxu0 0.0
        %896 = vmatprep.subr.mxu0 0.0
        %897 = vmatpush1.msra.mxu0 0.0
        %898 = vmatprep.subr.mxu0 0.0
        %899 = vmatpush1.msra.mxu0 0.0
        %900 = vmatprep.subr.mxu0 0.0
        %901 = vmatpush1.msra.mxu0 0.0
        %902 = vmatprep.subr.mxu0 0.0
        %903 = vmatpush1.msra.mxu0 0.0
        %904 = vmatprep.mubr.f32.mxu0 0.0
        %905 = vmatmul.mubr.f32.gmra.mrb[0].mxu0 %v838
        %v906 = vpop.f32.mrb[0].mxu0
        %v907 = vadd.f32 0.0, %v906
        %v908 = vpop.f32.mrb[0].mxu0
        %909 = vdwg.mxu0
        %v910 = vld [vmem:[#allocation13] sm:$0xff]
        %911 = vrot.lane.b32.xlu0 %v587, 120
        %v912 = vpop.permute.xlu0 %911
        %913 = vrot.lane.b32.xlu0 %v664, 120
        %v914 = vpop.permute.xlu0 %913
        %v915 = vsel %vm744, %v912, 0
        %v917 = vsel %vm744, %v914, 0
        %919 = vmatprep.subr.mxu0 0.0
        %920 = vmatpush1.xpose.msra.mxu0 %v917
        %921 = vmatprep.subr.mxu0 0.0
        %922 = vmatpush1.xpose.msra.mxu0 0.0
        %923 = vmatprep.subr.mxu0 0.0
        %924 = vmatpush1.xpose.msra.mxu0 0.0
        %925 = vmatprep.subr.mxu0 0.0
        %926 = vmatpush1.xpose.msra.mxu0 0.0
        %927 = vmatprep.subr.mxu0 0.0
        %928 = vmatpush1.xpose.msra.mxu0 0.0
        %929 = vmatprep.subr.mxu0 0.0
        %930 = vmatpush1.xpose.msra.mxu0 0.0
        %931 = vmatprep.subr.mxu0 0.0
        %932 = vmatpush1.xpose.msra.mxu0 0.0
        %933 = vmatprep.subr.mxu0 0.0
        %934 = vmatpush1.xpose.msra.mxu0 0.0
        %935 = vmatprep.subr.mxu0 0.0
        %936 = vmatpush1.xpose.msra.mxu0 0.0
        %937 = vmatprep.subr.mxu0 0.0
        %938 = vmatpush1.xpose.msra.mxu0 0.0
        %939 = vmatprep.subr.mxu0 0.0
        %940 = vmatpush1.xpose.msra.mxu0 0.0
        %941 = vmatprep.subr.mxu0 0.0
        %942 = vmatpush1.xpose.msra.mxu0 0.0
        %943 = vmatprep.subr.mxu0 0.0
        %944 = vmatpush1.xpose.msra.mxu0 0.0
        %945 = vmatprep.subr.mxu0 0.0
        %946 = vmatpush1.xpose.msra.mxu0 0.0
        %947 = vmatprep.subr.mxu0 0.0
        %948 = vmatpush1.xpose.msra.mxu0 0.0
        %949 = vmatprep.subr.mxu0 0.0
        %950 = vmatpush1.xpose.msra.mxu0 0.0
        %951 = vmatprep.subr.mxu0 0.0
        %952 = vmatpush1.xpose.msra.mxu0 0.0
        %953 = vmatprep.subr.mxu0 0.0
        %954 = vmatpush1.xpose.msra.mxu0 0.0
        %955 = vmatprep.subr.mxu0 0.0
        %956 = vmatpush1.xpose.msra.mxu0 0.0
        %957 = vmatprep.subr.mxu0 0.0
        %958 = vmatpush1.xpose.msra.mxu0 0.0
        %959 = vmatprep.subr.mxu0 0.0
        %960 = vmatpush1.xpose.msra.mxu0 0.0
        %961 = vmatprep.subr.mxu0 0.0
        %962 = vmatpush1.xpose.msra.mxu0 0.0
        %963 = vmatprep.subr.mxu0 0.0
        %964 = vmatpush1.xpose.msra.mxu0 0.0
        %965 = vmatprep.subr.mxu0 0.0
        %966 = vmatpush1.xpose.msra.mxu0 0.0
        %967 = vmatprep.subr.mxu0 0.0
        %968 = vmatpush1.xpose.msra.mxu0 0.0
        %969 = vmatprep.subr.mxu0 0.0
        %970 = vmatpush1.xpose.msra.mxu0 0.0
        %971 = vmatprep.subr.mxu0 0.0
        %972 = vmatpush1.xpose.msra.mxu0 0.0
        %973 = vmatprep.subr.mxu0 0.0
        %974 = vmatpush1.xpose.msra.mxu0 0.0
        %975 = vmatprep.subr.mxu0 0.0
        %976 = vmatpush1.xpose.msra.mxu0 0.0
        %977 = vmatprep.subr.mxu0 0.0
        %978 = vmatpush1.xpose.msra.mxu0 0.0
        %979 = vmatprep.subr.mxu0 0.0
        %980 = vmatpush1.xpose.msra.mxu0 0.0
        %981 = vmatprep.subr.mxu0 0.0
        %982 = vmatpush1.xpose.msra.mxu0 0.0
        %983 = vmatprep.mubr.f32.mxu0 0.0
        %984 = vmatmul.mubr.f32.gmra.mrb[0].mxu0 %v915
        %v985 = vpop.f32.mrb[0].mxu0
        %v986 = vadd.f32 0.0, %v985
        %v987 = vpop.f32.mrb[0].mxu0
        %988 = vdwg.mxu0
        %v989 = vsel %vm823, -1e+09, %v986
        %v990 = vsel %vm744, %v989, -inf
        %991 = vmax.xlane.f32.xlu0 %v990
        %v992 = vpop.xlane.xlu0 %991
        %v993 = vsub.f32 %v989, %v992
        %v994 = vmul.f32 %v993, 1.442695
        %v995 = vpow.pop %v994
        %v996 = vsel %vm744, %v995, 0.0
        %997 = vadd.xlane.f32.xlu0 %v996
        %v998 = vpop.xlane.xlu0 %997
        %v999 = vrcp.pop %v998
        %v1000 = vmul.f32 %v995, %v999
        %s1001 = scalar_lea.vmem %s500, 8 [#allocation15]
        %1002 = vst.msk [vmem:[%s1001] sm:$0xff] %vm744, %v1000
        %1004 = vrot.lane.b32.xlu0 %v741, 120
        %v1005 = vpop.permute.xlu0 %1004
        %v1008 = vsel %vm744, %v1000, 0
        %1010 = vmatprep.subr.mxu0 0.0
        %1011 = vmatpush1.msra.mxu0 %v1005
        %1012 = vmatprep.subr.mxu0 0.0
        %1013 = vmatpush1.msra.mxu0 0.0
        %1014 = vmatprep.subr.mxu0 0.0
        %1015 = vmatpush1.msra.mxu0 0.0
        %1016 = vmatprep.subr.mxu0 0.0
        %1017 = vmatpush1.msra.mxu0 0.0
        %1018 = vmatprep.subr.mxu0 0.0
        %1019 = vmatpush1.msra.mxu0 0.0
        %1020 = vmatprep.subr.mxu0 0.0
        %1021 = vmatpush1.msra.mxu0 0.0
        %1022 = vmatprep.subr.mxu0 0.0
        %1023 = vmatpush1.msra.mxu0 0.0
        %1024 = vmatprep.subr.mxu0 0.0
        %1025 = vmatpush1.msra.mxu0 0.0
        %1026 = vmatprep.subr.mxu0 0.0
        %1027 = vmatpush1.msra.mxu0 0.0
        %1028 = vmatprep.subr.mxu0 0.0
        %1029 = vmatpush1.msra.mxu0 0.0
        %1030 = vmatprep.subr.mxu0 0.0
        %1031 = vmatpush1.msra.mxu0 0.0
        %1032 = vmatprep.subr.mxu0 0.0
        %1033 = vmatpush1.msra.mxu0 0.0
        %1034 = vmatprep.subr.mxu0 0.0
        %1035 = vmatpush1.msra.mxu0 0.0
        %1036 = vmatprep.subr.mxu0 0.0
        %1037 = vmatpush1.msra.mxu0 0.0
        %1038 = vmatprep.subr.mxu0 0.0
        %1039 = vmatpush1.msra.mxu0 0.0
        %1040 = vmatprep.subr.mxu0 0.0
        %1041 = vmatpush1.msra.mxu0 0.0
        %1042 = vmatprep.subr.mxu0 0.0
        %1043 = vmatpush1.msra.mxu0 0.0
        %1044 = vmatprep.subr.mxu0 0.0
        %1045 = vmatpush1.msra.mxu0 0.0
        %1046 = vmatprep.subr.mxu0 0.0
        %1047 = vmatpush1.msra.mxu0 0.0
        %1048 = vmatprep.subr.mxu0 0.0
        %1049 = vmatpush1.msra.mxu0 0.0
        %1050 = vmatprep.subr.mxu0 0.0
        %1051 = vmatpush1.msra.mxu0 0.0
        %1052 = vmatprep.subr.mxu0 0.0
        %1053 = vmatpush1.msra.mxu0 0.0
        %1054 = vmatprep.subr.mxu0 0.0
        %1055 = vmatpush1.msra.mxu0 0.0
        %1056 = vmatprep.subr.mxu0 0.0
        %1057 = vmatpush1.msra.mxu0 0.0
        %1058 = vmatprep.subr.mxu0 0.0
        %1059 = vmatpush1.msra.mxu0 0.0
        %1060 = vmatprep.subr.mxu0 0.0
        %1061 = vmatpush1.msra.mxu0 0.0
        %1062 = vmatprep.subr.mxu0 0.0
        %1063 = vmatpush1.msra.mxu0 0.0
        %1064 = vmatprep.subr.mxu0 0.0
        %1065 = vmatpush1.msra.mxu0 0.0
        %1066 = vmatprep.subr.mxu0 0.0
        %1067 = vmatpush1.msra.mxu0 0.0
        %1068 = vmatprep.subr.mxu0 0.0
        %1069 = vmatpush1.msra.mxu0 0.0
        %1070 = vmatprep.subr.mxu0 0.0
        %1071 = vmatpush1.msra.mxu0 0.0
        %1072 = vmatprep.subr.mxu0 0.0
        %1073 = vmatpush1.msra.mxu0 0.0
        %1074 = vmatprep.mubr.f32.mxu0 0.0
        %1075 = vmatmul.mubr.f32.gmra.mrb[0].mxu0 %v1008
        %v1076 = vpop.f32.mrb[0].mxu0
        %v1077 = vadd.f32 0.0, %v1076
        %v1078 = vpop.f32.mrb[0].mxu0
        %1079 = vdwg.mxu0
        %v1080 = vld [vmem:[#allocation13 + $0x8] sm:$0xff]
        %v1082 = vsel %vm744, %v1077, 0
        %1084 = vmatprep.subr.mxu0 0.0
        %1085 = vmatpush1.msra.mxu0 %v1080
        %1086 = vmatprep.subr.mxu0 0.0
        %1087 = vmatpush1.msra.mxu0 0.0
        %1088 = vmatprep.subr.mxu0 0.0
        %1089 = vmatpush1.msra.mxu0 0.0
        %1090 = vmatprep.subr.mxu0 0.0
        %1091 = vmatpush1.msra.mxu0 0.0
        %1092 = vmatprep.subr.mxu0 0.0
        %1093 = vmatpush1.msra.mxu0 0.0
        %1094 = vmatprep.subr.mxu0 0.0
        %1095 = vmatpush1.msra.mxu0 0.0
        %1096 = vmatprep.subr.mxu0 0.0
        %1097 = vmatpush1.msra.mxu0 0.0
        %1098 = vmatprep.subr.mxu0 0.0
        %1099 = vmatpush1.msra.mxu0 0.0
        %1100 = vmatprep.subr.mxu0 0.0
        %1101 = vmatpush1.msra.mxu0 0.0
        %1102 = vmatprep.subr.mxu0 0.0
        %1103 = vmatpush1.msra.mxu0 0.0
        %1104 = vmatprep.subr.mxu0 0.0
        %1105 = vmatpush1.msra.mxu0 0.0
        %1106 = vmatprep.subr.mxu0 0.0
        %1107 = vmatpush1.msra.mxu0 0.0
        %1108 = vmatprep.subr.mxu0 0.0
        %1109 = vmatpush1.msra.mxu0 0.0
        %1110 = vmatprep.subr.mxu0 0.0
        %1111 = vmatpush1.msra.mxu0 0.0
        %1112 = vmatprep.subr.mxu0 0.0
        %1113 = vmatpush1.msra.mxu0 0.0
        %1114 = vmatprep.subr.mxu0 0.0
        %1115 = vmatpush1.msra.mxu0 0.0
        %1116 = vmatprep.subr.mxu0 0.0
        %1117 = vmatpush1.msra.mxu0 0.0
        %1118 = vmatprep.subr.mxu0 0.0
        %1119 = vmatpush1.msra.mxu0 0.0
        %1120 = vmatprep.subr.mxu0 0.0
        %1121 = vmatpush1.msra.mxu0 0.0
        %1122 = vmatprep.subr.mxu0 0.0
        %1123 = vmatpush1.msra.mxu0 0.0
        %1124 = vmatprep.subr.mxu0 0.0
        %1125 = vmatpush1.msra.mxu0 0.0
        %1126 = vmatprep.subr.mxu0 0.0
        %1127 = vmatpush1.msra.mxu0 0.0
        %1128 = vmatprep.subr.mxu0 0.0
        %1129 = vmatpush1.msra.mxu0 0.0
        %1130 = vmatprep.subr.mxu0 0.0
        %1131 = vmatpush1.msra.mxu0 0.0
        %1132 = vmatprep.subr.mxu0 0.0
        %1133 = vmatpush1.msra.mxu0 0.0
        %1134 = vmatprep.subr.mxu0 0.0
        %1135 = vmatpush1.msra.mxu0 0.0
        %1136 = vmatprep.subr.mxu0 0.0
        %1137 = vmatpush1.msra.mxu0 0.0
        %1138 = vmatprep.subr.mxu0 0.0
        %1139 = vmatpush1.msra.mxu0 0.0
        %1140 = vmatprep.subr.mxu0 0.0
        %1141 = vmatpush1.msra.mxu0 0.0
        %1142 = vmatprep.subr.mxu0 0.0
        %1143 = vmatpush1.msra.mxu0 0.0
        %1144 = vmatprep.subr.mxu0 0.0
        %1145 = vmatpush1.msra.mxu0 0.0
        %1146 = vmatprep.subr.mxu0 0.0
        %1147 = vmatpush1.msra.mxu0 0.0
        %1148 = vmatprep.mubr.f32.mxu0 0.0
        %1149 = vmatmul.mubr.f32.gmra.mrb[0].mxu0 %v1082
        %v1150 = vpop.f32.mrb[0].mxu0
        %v1151 = vadd.f32 0.0, %v1150
        %v1152 = vpop.f32.mrb[0].mxu0
        %1153 = vdwg.mxu0
        %v1155 = vsel %vm744, %v907, 0
        %1157 = vmatprep.subr.mxu0 0.0
        %1158 = vmatpush1.msra.mxu0 %v910
        %1159 = vmatprep.subr.mxu0 0.0
        %1160 = vmatpush1.msra.mxu0 0.0
        %1161 = vmatprep.subr.mxu0 0.0
        %1162 = vmatpush1.msra.mxu0 0.0
        %1163 = vmatprep.subr.mxu0 0.0
        %1164 = vmatpush1.msra.mxu0 0.0
        %1165 = vmatprep.subr.mxu0 0.0
        %1166 = vmatpush1.msra.mxu0 0.0
        %1167 = vmatprep.subr.mxu0 0.0
        %1168 = vmatpush1.msra.mxu0 0.0
        %1169 = vmatprep.subr.mxu0 0.0
        %1170 = vmatpush1.msra.mxu0 0.0
        %1171 = vmatprep.subr.mxu0 0.0
        %1172 = vmatpush1.msra.mxu0 0.0
        %1173 = vmatprep.subr.mxu0 0.0
        %1174 = vmatpush1.msra.mxu0 0.0
        %1175 = vmatprep.subr.mxu0 0.0
        %1176 = vmatpush1.msra.mxu0 0.0
        %1177 = vmatprep.subr.mxu0 0.0
        %1178 = vmatpush1.msra.mxu0 0.0
        %1179 = vmatprep.subr.mxu0 0.0
        %1180 = vmatpush1.msra.mxu0 0.0
        %1181 = vmatprep.subr.mxu0 0.0
        %1182 = vmatpush1.msra.mxu0 0.0
        %1183 = vmatprep.subr.mxu0 0.0
        %1184 = vmatpush1.msra.mxu0 0.0
        %1185 = vmatprep.subr.mxu0 0.0
        %1186 = vmatpush1.msra.mxu0 0.0
        %1187 = vmatprep.subr.mxu0 0.0
        %1188 = vmatpush1.msra.mxu0 0.0
        %1189 = vmatprep.subr.mxu0 0.0
        %1190 = vmatpush1.msra.mxu0 0.0
        %1191 = vmatprep.subr.mxu0 0.0
        %1192 = vmatpush1.msra.mxu0 0.0
        %1193 = vmatprep.subr.mxu0 0.0
        %1194 = vmatpush1.msra.mxu0 0.0
        %1195 = vmatprep.subr.mxu0 0.0
        %1196 = vmatpush1.msra.mxu0 0.0
        %1197 = vmatprep.subr.mxu0 0.0
        %1198 = vmatpush1.msra.mxu0 0.0
        %1199 = vmatprep.subr.mxu0 0.0
        %1200 = vmatpush1.msra.mxu0 0.0
        %1201 = vmatprep.subr.mxu0 0.0
        %1202 = vmatpush1.msra.mxu0 0.0
        %1203 = vmatprep.subr.mxu0 0.0
        %1204 = vmatpush1.msra.mxu0 0.0
        %1205 = vmatprep.subr.mxu0 0.0
        %1206 = vmatpush1.msra.mxu0 0.0
        %1207 = vmatprep.subr.mxu0 0.0
        %1208 = vmatpush1.msra.mxu0 0.0
        %1209 = vmatprep.subr.mxu0 0.0
        %1210 = vmatpush1.msra.mxu0 0.0
        %1211 = vmatprep.subr.mxu0 0.0
        %1212 = vmatpush1.msra.mxu0 0.0
        %1213 = vmatprep.subr.mxu0 0.0
        %1214 = vmatpush1.msra.mxu0 0.0
        %1215 = vmatprep.subr.mxu0 0.0
        %1216 = vmatpush1.msra.mxu0 0.0
        %1217 = vmatprep.subr.mxu0 0.0
        %1218 = vmatpush1.msra.mxu0 0.0
        %1219 = vmatprep.subr.mxu0 0.0
        %1220 = vmatpush1.msra.mxu0 0.0
        %1221 = vmatprep.mubr.f32.mxu0 0.0
        %1222 = vmatmul.mubr.f32.gmra.mrb[0].mxu0 %v1155
        %v1223 = vpop.f32.mrb[0].mxu0
        %v1224 = vadd.f32 %v1151, %v1223
        %v1225 = vpop.f32.mrb[0].mxu0
        %1226 = vdwg.mxu0
        %1227 = vrot.lane.b32.xlu0 %v587, 112
        %v1228 = vpop.permute.xlu0 %1227
        %1229 = vrot.lane.b32.xlu0 %v664, 112
        %v1230 = vpop.permute.xlu0 %1229
        %v1231 = vsel %vm744, %v1228, 0
        %v1233 = vsel %vm744, %v1230, 0
        %1235 = vmatprep.subr.mxu0 0.0
        %1236 = vmatpush1.xpose.msra.mxu0 %v1233
        %1237 = vmatprep.subr.mxu0 0.0
        %1238 = vmatpush1.xpose.msra.mxu0 0.0
        %1239 = vmatprep.subr.mxu0 0.0
        %1240 = vmatpush1.xpose.msra.mxu0 0.0
        %1241 = vmatprep.subr.mxu0 0.0
        %1242 = vmatpush1.xpose.msra.mxu0 0.0
        %1243 = vmatprep.subr.mxu0 0.0
        %1244 = vmatpush1.xpose.msra.mxu0 0.0
        %1245 = vmatprep.subr.mxu0 0.0
        %1246 = vmatpush1.xpose.msra.mxu0 0.0
        %1247 = vmatprep.subr.mxu0 0.0
        %1248 = vmatpush1.xpose.msra.mxu0 0.0
        %1249 = vmatprep.subr.mxu0 0.0
        %1250 = vmatpush1.xpose.msra.mxu0 0.0
        %1251 = vmatprep.subr.mxu0 0.0
        %1252 = vmatpush1.xpose.msra.mxu0 0.0
        %1253 = vmatprep.subr.mxu0 0.0
        %1254 = vmatpush1.xpose.msra.mxu0 0.0
        %1255 = vmatprep.subr.mxu0 0.0
        %1256 = vmatpush1.xpose.msra.mxu0 0.0
        %1257 = vmatprep.subr.mxu0 0.0
        %1258 = vmatpush1.xpose.msra.mxu0 0.0
        %1259 = vmatprep.subr.mxu0 0.0
        %1260 = vmatpush1.xpose.msra.mxu0 0.0
        %1261 = vmatprep.subr.mxu0 0.0
        %1262 = vmatpush1.xpose.msra.mxu0 0.0
        %1263 = vmatprep.subr.mxu0 0.0
        %1264 = vmatpush1.xpose.msra.mxu0 0.0
        %1265 = vmatprep.subr.mxu0 0.0
        %1266 = vmatpush1.xpose.msra.mxu0 0.0
        %1267 = vmatprep.subr.mxu0 0.0
        %1268 = vmatpush1.xpose.msra.mxu0 0.0
        %1269 = vmatprep.subr.mxu0 0.0
        %1270 = vmatpush1.xpose.msra.mxu0 0.0
        %1271 = vmatprep.subr.mxu0 0.0
        %1272 = vmatpush1.xpose.msra.mxu0 0.0
        %1273 = vmatprep.subr.mxu0 0.0
        %1274 = vmatpush1.xpose.msra.mxu0 0.0
        %1275 = vmatprep.subr.mxu0 0.0
        %1276 = vmatpush1.xpose.msra.mxu0 0.0
        %1277 = vmatprep.subr.mxu0 0.0
        %1278 = vmatpush1.xpose.msra.mxu0 0.0
        %1279 = vmatprep.subr.mxu0 0.0
        %1280 = vmatpush1.xpose.msra.mxu0 0.0
        %1281 = vmatprep.subr.mxu0 0.0
        %1282 = vmatpush1.xpose.msra.mxu0 0.0
        %1283 = vmatprep.subr.mxu0 0.0
        %1284 = vmatpush1.xpose.msra.mxu0 0.0
        %1285 = vmatprep.subr.mxu0 0.0
        %1286 = vmatpush1.xpose.msra.mxu0 0.0
        %1287 = vmatprep.subr.mxu0 0.0
        %1288 = vmatpush1.xpose.msra.mxu0 0.0
        %1289 = vmatprep.subr.mxu0 0.0
        %1290 = vmatpush1.xpose.msra.mxu0 0.0
        %1291 = vmatprep.subr.mxu0 0.0
        %1292 = vmatpush1.xpose.msra.mxu0 0.0
        %1293 = vmatprep.subr.mxu0 0.0
        %1294 = vmatpush1.xpose.msra.mxu0 0.0
        %1295 = vmatprep.subr.mxu0 0.0
        %1296 = vmatpush1.xpose.msra.mxu0 0.0
        %1297 = vmatprep.subr.mxu0 0.0
        %1298 = vmatpush1.xpose.msra.mxu0 0.0
        %1299 = vmatprep.mubr.f32.mxu0 0.0
        %1300 = vmatmul.mubr.f32.gmra.mrb[0].mxu0 %v1231
        %v1301 = vpop.f32.mrb[0].mxu0
        %v1302 = vadd.f32 0.0, %v1301
        %v1303 = vpop.f32.mrb[0].mxu0
        %1304 = vdwg.mxu0
        %v1305 = vsel %vm823, -1e+09, %v1302
        %v1306 = vsel %vm744, %v1305, -inf
        %1307 = vmax.xlane.f32.xlu0 %v1306
        %v1308 = vpop.xlane.xlu0 %1307
        %v1309 = vsub.f32 %v1305, %v1308
        %v1310 = vmul.f32 %v1309, 1.442695
        %v1311 = vpow.pop %v1310
        %v1312 = vsel %vm744, %v1311, 0.0
        %1313 = vadd.xlane.f32.xlu0 %v1312
        %v1314 = vpop.xlane.xlu0 %1313
        %v1315 = vrcp.pop %v1314
        %v1316 = vmul.f32 %v1311, %v1315
        %s1317 = scalar_lea.vmem %s500, 16 [#allocation15]
        %1318 = vst.msk [vmem:[%s1317] sm:$0xff] %vm744, %v1316
        %1319 = vrot.lane.b32.xlu0 %v741, 112
        %v1320 = vpop.permute.xlu0 %1319
        %v1323 = vsel %vm744, %v1316, 0
        %1325 = vmatprep.subr.mxu0 0.0
        %1326 = vmatpush1.msra.mxu0 %v1320
        %1327 = vmatprep.subr.mxu0 0.0
        %1328 = vmatpush1.msra.mxu0 0.0
        %1329 = vmatprep.subr.mxu0 0.0
        %1330 = vmatpush1.msra.mxu0 0.0
        %1331 = vmatprep.subr.mxu0 0.0
        %1332 = vmatpush1.msra.mxu0 0.0
        %1333 = vmatprep.subr.mxu0 0.0
        %1334 = vmatpush1.msra.mxu0 0.0
        %1335 = vmatprep.subr.mxu0 0.0
        %1336 = vmatpush1.msra.mxu0 0.0
        %1337 = vmatprep.subr.mxu0 0.0
        %1338 = vmatpush1.msra.mxu0 0.0
        %1339 = vmatprep.subr.mxu0 0.0
        %1340 = vmatpush1.msra.mxu0 0.0
        %1341 = vmatprep.subr.mxu0 0.0
        %1342 = vmatpush1.msra.mxu0 0.0
        %1343 = vmatprep.subr.mxu0 0.0
        %1344 = vmatpush1.msra.mxu0 0.0
        %1345 = vmatprep.subr.mxu0 0.0
        %1346 = vmatpush1.msra.mxu0 0.0
        %1347 = vmatprep.subr.mxu0 0.0
        %1348 = vmatpush1.msra.mxu0 0.0
        %1349 = vmatprep.subr.mxu0 0.0
        %1350 = vmatpush1.msra.mxu0 0.0
        %1351 = vmatprep.subr.mxu0 0.0
        %1352 = vmatpush1.msra.mxu0 0.0
        %1353 = vmatprep.subr.mxu0 0.0
        %1354 = vmatpush1.msra.mxu0 0.0
        %1355 = vmatprep.subr.mxu0 0.0
        %1356 = vmatpush1.msra.mxu0 0.0
        %1357 = vmatprep.subr.mxu0 0.0
        %1358 = vmatpush1.msra.mxu0 0.0
        %1359 = vmatprep.subr.mxu0 0.0
        %1360 = vmatpush1.msra.mxu0 0.0
        %1361 = vmatprep.subr.mxu0 0.0
        %1362 = vmatpush1.msra.mxu0 0.0
        %1363 = vmatprep.subr.mxu0 0.0
        %1364 = vmatpush1.msra.mxu0 0.0
        %1365 = vmatprep.subr.mxu0 0.0
        %1366 = vmatpush1.msra.mxu0 0.0
        %1367 = vmatprep.subr.mxu0 0.0
        %1368 = vmatpush1.msra.mxu0 0.0
        %1369 = vmatprep.subr.mxu0 0.0
        %1370 = vmatpush1.msra.mxu0 0.0
        %1371 = vmatprep.subr.mxu0 0.0
        %1372 = vmatpush1.msra.mxu0 0.0
        %1373 = vmatprep.subr.mxu0 0.0
        %1374 = vmatpush1.msra.mxu0 0.0
        %1375 = vmatprep.subr.mxu0 0.0
        %1376 = vmatpush1.msra.mxu0 0.0
        %1377 = vmatprep.subr.mxu0 0.0
        %1378 = vmatpush1.msra.mxu0 0.0
        %1379 = vmatprep.subr.mxu0 0.0
        %1380 = vmatpush1.msra.mxu0 0.0
        %1381 = vmatprep.subr.mxu0 0.0
        %1382 = vmatpush1.msra.mxu0 0.0
        %1383 = vmatprep.subr.mxu0 0.0
        %1384 = vmatpush1.msra.mxu0 0.0
        %1385 = vmatprep.subr.mxu0 0.0
        %1386 = vmatpush1.msra.mxu0 0.0
        %1387 = vmatprep.subr.mxu0 0.0
        %1388 = vmatpush1.msra.mxu0 0.0
        %1389 = vmatprep.mubr.f32.mxu0 0.0
        %1390 = vmatmul.mubr.f32.gmra.mrb[0].mxu0 %v1323
        %v1391 = vpop.f32.mrb[0].mxu0
        %v1392 = vadd.f32 0.0, %v1391
        %v1393 = vpop.f32.mrb[0].mxu0
        %1394 = vdwg.mxu0
        %v1395 = vld [vmem:[#allocation13 + $0x10] sm:$0xff]
        %v1397 = vsel %vm744, %v1392, 0
        %1399 = vmatprep.subr.mxu0 0.0
        %1400 = vmatpush1.msra.mxu0 %v1395
        %1401 = vmatprep.subr.mxu0 0.0
        %1402 = vmatpush1.msra.mxu0 0.0
        %1403 = vmatprep.subr.mxu0 0.0
        %1404 = vmatpush1.msra.mxu0 0.0
        %1405 = vmatprep.subr.mxu0 0.0
        %1406 = vmatpush1.msra.mxu0 0.0
        %1407 = vmatprep.subr.mxu0 0.0
        %1408 = vmatpush1.msra.mxu0 0.0
        %1409 = vmatprep.subr.mxu0 0.0
        %1410 = vmatpush1.msra.mxu0 0.0
        %1411 = vmatprep.subr.mxu0 0.0
        %1412 = vmatpush1.msra.mxu0 0.0
        %1413 = vmatprep.subr.mxu0 0.0
        %1414 = vmatpush1.msra.mxu0 0.0
        %1415 = vmatprep.subr.mxu0 0.0
        %1416 = vmatpush1.msra.mxu0 0.0
        %1417 = vmatprep.subr.mxu0 0.0
        %1418 = vmatpush1.msra.mxu0 0.0
        %1419 = vmatprep.subr.mxu0 0.0
        %1420 = vmatpush1.msra.mxu0 0.0
        %1421 = vmatprep.subr.mxu0 0.0
        %1422 = vmatpush1.msra.mxu0 0.0
        %1423 = vmatprep.subr.mxu0 0.0
        %1424 = vmatpush1.msra.mxu0 0.0
        %1425 = vmatprep.subr.mxu0 0.0
        %1426 = vmatpush1.msra.mxu0 0.0
        %1427 = vmatprep.subr.mxu0 0.0
        %1428 = vmatpush1.msra.mxu0 0.0
        %1429 = vmatprep.subr.mxu0 0.0
        %1430 = vmatpush1.msra.mxu0 0.0
        %1431 = vmatprep.subr.mxu0 0.0
        %1432 = vmatpush1.msra.mxu0 0.0
        %1433 = vmatprep.subr.mxu0 0.0
        %1434 = vmatpush1.msra.mxu0 0.0
        %1435 = vmatprep.subr.mxu0 0.0
        %1436 = vmatpush1.msra.mxu0 0.0
        %1437 = vmatprep.subr.mxu0 0.0
        %1438 = vmatpush1.msra.mxu0 0.0
        %1439 = vmatprep.subr.mxu0 0.0
        %1440 = vmatpush1.msra.mxu0 0.0
        %1441 = vmatprep.subr.mxu0 0.0
        %1442 = vmatpush1.msra.mxu0 0.0
        %1443 = vmatprep.subr.mxu0 0.0
        %1444 = vmatpush1.msra.mxu0 0.0
        %1445 = vmatprep.subr.mxu0 0.0
        %1446 = vmatpush1.msra.mxu0 0.0
        %1447 = vmatprep.subr.mxu0 0.0
        %1448 = vmatpush1.msra.mxu0 0.0
        %1449 = vmatprep.subr.mxu0 0.0
        %1450 = vmatpush1.msra.mxu0 0.0
        %1451 = vmatprep.subr.mxu0 0.0
        %1452 = vmatpush1.msra.mxu0 0.0
        %1453 = vmatprep.subr.mxu0 0.0
        %1454 = vmatpush1.msra.mxu0 0.0
        %1455 = vmatprep.subr.mxu0 0.0
        %1456 = vmatpush1.msra.mxu0 0.0
        %1457 = vmatprep.subr.mxu0 0.0
        %1458 = vmatpush1.msra.mxu0 0.0
        %1459 = vmatprep.subr.mxu0 0.0
        %1460 = vmatpush1.msra.mxu0 0.0
        %1461 = vmatprep.subr.mxu0 0.0
        %1462 = vmatpush1.msra.mxu0 0.0
        %1463 = vmatprep.mubr.f32.mxu0 0.0
        %1464 = vmatmul.mubr.f32.gmra.mrb[0].mxu0 %v1397
        %v1465 = vpop.f32.mrb[0].mxu0
        %v1466 = vadd.f32 0.0, %v1465
        %v1467 = vpop.f32.mrb[0].mxu0
        %1468 = vdwg.mxu0
        %v1469 = vadd.f32 %v1224, %v1466
        %1470 = vrot.lane.b32.xlu0 %v587, 104
        %v1471 = vpop.permute.xlu0 %1470
        %1472 = vrot.lane.b32.xlu0 %v664, 104
        %v1473 = vpop.permute.xlu0 %1472
        %v1474 = vsel %vm744, %v1471, 0
        %v1476 = vsel %vm744, %v1473, 0
        %1478 = vmatprep.subr.mxu0 0.0
        %1479 = vmatpush1.xpose.msra.mxu0 %v1476
        %1480 = vmatprep.subr.mxu0 0.0
        %1481 = vmatpush1.xpose.msra.mxu0 0.0
        %1482 = vmatprep.subr.mxu0 0.0
        %1483 = vmatpush1.xpose.msra.mxu0 0.0
        %1484 = vmatprep.subr.mxu0 0.0
        %1485 = vmatpush1.xpose.msra.mxu0 0.0
        %1486 = vmatprep.subr.mxu0 0.0
        %1487 = vmatpush1.xpose.msra.mxu0 0.0
        %1488 = vmatprep.subr.mxu0 0.0
        %1489 = vmatpush1.xpose.msra.mxu0 0.0
        %1490 = vmatprep.subr.mxu0 0.0
        %1491 = vmatpush1.xpose.msra.mxu0 0.0
        %1492 = vmatprep.subr.mxu0 0.0
        %1493 = vmatpush1.xpose.msra.mxu0 0.0
        %1494 = vmatprep.subr.mxu0 0.0
        %1495 = vmatpush1.xpose.msra.mxu0 0.0
        %1496 = vmatprep.subr.mxu0 0.0
        %1497 = vmatpush1.xpose.msra.mxu0 0.0
        %1498 = vmatprep.subr.mxu0 0.0
        %1499 = vmatpush1.xpose.msra.mxu0 0.0
        %1500 = vmatprep.subr.mxu0 0.0
        %1501 = vmatpush1.xpose.msra.mxu0 0.0
        %1502 = vmatprep.subr.mxu0 0.0
        %1503 = vmatpush1.xpose.msra.mxu0 0.0
        %1504 = vmatprep.subr.mxu0 0.0
        %1505 = vmatpush1.xpose.msra.mxu0 0.0
        %1506 = vmatprep.subr.mxu0 0.0
        %1507 = vmatpush1.xpose.msra.mxu0 0.0
        %1508 = vmatprep.subr.mxu0 0.0
        %1509 = vmatpush1.xpose.msra.mxu0 0.0
        %1510 = vmatprep.subr.mxu0 0.0
        %1511 = vmatpush1.xpose.msra.mxu0 0.0
        %1512 = vmatprep.subr.mxu0 0.0
        %1513 = vmatpush1.xpose.msra.mxu0 0.0
        %1514 = vmatprep.subr.mxu0 0.0
        %1515 = vmatpush1.xpose.msra.mxu0 0.0
        %1516 = vmatprep.subr.mxu0 0.0
        %1517 = vmatpush1.xpose.msra.mxu0 0.0
        %1518 = vmatprep.subr.mxu0 0.0
        %1519 = vmatpush1.xpose.msra.mxu0 0.0
        %1520 = vmatprep.subr.mxu0 0.0
        %1521 = vmatpush1.xpose.msra.mxu0 0.0
        %1522 = vmatprep.subr.mxu0 0.0
        %1523 = vmatpush1.xpose.msra.mxu0 0.0
        %1524 = vmatprep.subr.mxu0 0.0
        %1525 = vmatpush1.xpose.msra.mxu0 0.0
        %1526 = vmatprep.subr.mxu0 0.0
        %1527 = vmatpush1.xpose.msra.mxu0 0.0
        %1528 = vmatprep.subr.mxu0 0.0
        %1529 = vmatpush1.xpose.msra.mxu0 0.0
        %1530 = vmatprep.subr.mxu0 0.0
        %1531 = vmatpush1.xpose.msra.mxu0 0.0
        %1532 = vmatprep.subr.mxu0 0.0
        %1533 = vmatpush1.xpose.msra.mxu0 0.0
        %1534 = vmatprep.subr.mxu0 0.0
        %1535 = vmatpush1.xpose.msra.mxu0 0.0
        %1536 = vmatprep.subr.mxu0 0.0
        %1537 = vmatpush1.xpose.msra.mxu0 0.0
        %1538 = vmatprep.subr.mxu0 0.0
        %1539 = vmatpush1.xpose.msra.mxu0 0.0
        %1540 = vmatprep.subr.mxu0 0.0
        %1541 = vmatpush1.xpose.msra.mxu0 0.0
        %1542 = vmatprep.mubr.f32.mxu0 0.0
        %1543 = vmatmul.mubr.f32.gmra.mrb[0].mxu0 %v1474
        %v1544 = vpop.f32.mrb[0].mxu0
        %v1545 = vadd.f32 0.0, %v1544
        %v1546 = vpop.f32.mrb[0].mxu0
        %1547 = vdwg.mxu0
        %v1548 = vsel %vm823, -1e+09, %v1545
        %v1549 = vsel %vm744, %v1548, -inf
        %1550 = vmax.xlane.f32.xlu0 %v1549
        %v1551 = vpop.xlane.xlu0 %1550
        %v1552 = vsub.f32 %v1548, %v1551
        %v1553 = vmul.f32 %v1552, 1.442695
        %v1554 = vpow.pop %v1553
        %v1555 = vsel %vm744, %v1554, 0.0
        %1556 = vadd.xlane.f32.xlu0 %v1555
        %v1557 = vpop.xlane.xlu0 %1556
        %v1558 = vrcp.pop %v1557
        %v1559 = vmul.f32 %v1554, %v1558
        %s1560 = scalar_lea.vmem %s500, 24 [#allocation15]
        %1561 = vst.msk [vmem:[%s1560] sm:$0xff] %vm744, %v1559
        %1562 = vrot.lane.b32.xlu0 %v741, 104
        %v1563 = vpop.permute.xlu0 %1562
        %v1566 = vsel %vm744, %v1559, 0
        %1568 = vmatprep.subr.mxu0 0.0
        %1569 = vmatpush1.msra.mxu0 %v1563
        %1570 = vmatprep.subr.mxu0 0.0
        %1571 = vmatpush1.msra.mxu0 0.0
        %1572 = vmatprep.subr.mxu0 0.0
        %1573 = vmatpush1.msra.mxu0 0.0
        %1574 = vmatprep.subr.mxu0 0.0
        %1575 = vmatpush1.msra.mxu0 0.0
        %1576 = vmatprep.subr.mxu0 0.0
        %1577 = vmatpush1.msra.mxu0 0.0
        %1578 = vmatprep.subr.mxu0 0.0
        %1579 = vmatpush1.msra.mxu0 0.0
        %1580 = vmatprep.subr.mxu0 0.0
        %1581 = vmatpush1.msra.mxu0 0.0
        %1582 = vmatprep.subr.mxu0 0.0
        %1583 = vmatpush1.msra.mxu0 0.0
        %1584 = vmatprep.subr.mxu0 0.0
        %1585 = vmatpush1.msra.mxu0 0.0
        %1586 = vmatprep.subr.mxu0 0.0
        %1587 = vmatpush1.msra.mxu0 0.0
        %1588 = vmatprep.subr.mxu0 0.0
        %1589 = vmatpush1.msra.mxu0 0.0
        %1590 = vmatprep.subr.mxu0 0.0
        %1591 = vmatpush1.msra.mxu0 0.0
        %1592 = vmatprep.subr.mxu0 0.0
        %1593 = vmatpush1.msra.mxu0 0.0
        %1594 = vmatprep.subr.mxu0 0.0
        %1595 = vmatpush1.msra.mxu0 0.0
        %1596 = vmatprep.subr.mxu0 0.0
        %1597 = vmatpush1.msra.mxu0 0.0
        %1598 = vmatprep.subr.mxu0 0.0
        %1599 = vmatpush1.msra.mxu0 0.0
        %1600 = vmatprep.subr.mxu0 0.0
        %1601 = vmatpush1.msra.mxu0 0.0
        %1602 = vmatprep.subr.mxu0 0.0
        %1603 = vmatpush1.msra.mxu0 0.0
        %1604 = vmatprep.subr.mxu0 0.0
        %1605 = vmatpush1.msra.mxu0 0.0
        %1606 = vmatprep.subr.mxu0 0.0
        %1607 = vmatpush1.msra.mxu0 0.0
        %1608 = vmatprep.subr.mxu0 0.0
        %1609 = vmatpush1.msra.mxu0 0.0
        %1610 = vmatprep.subr.mxu0 0.0
        %1611 = vmatpush1.msra.mxu0 0.0
        %1612 = vmatprep.subr.mxu0 0.0
        %1613 = vmatpush1.msra.mxu0 0.0
        %1614 = vmatprep.subr.mxu0 0.0
        %1615 = vmatpush1.msra.mxu0 0.0
        %1616 = vmatprep.subr.mxu0 0.0
        %1617 = vmatpush1.msra.mxu0 0.0
        %1618 = vmatprep.subr.mxu0 0.0
        %1619 = vmatpush1.msra.mxu0 0.0
        %1620 = vmatprep.subr.mxu0 0.0
        %1621 = vmatpush1.msra.mxu0 0.0
        %1622 = vmatprep.subr.mxu0 0.0
        %1623 = vmatpush1.msra.mxu0 0.0
        %1624 = vmatprep.subr.mxu0 0.0
        %1625 = vmatpush1.msra.mxu0 0.0
        %1626 = vmatprep.subr.mxu0 0.0
        %1627 = vmatpush1.msra.mxu0 0.0
        %1628 = vmatprep.subr.mxu0 0.0
        %1629 = vmatpush1.msra.mxu0 0.0
        %1630 = vmatprep.subr.mxu0 0.0
        %1631 = vmatpush1.msra.mxu0 0.0
        %1632 = vmatprep.mubr.f32.mxu0 0.0
        %1633 = vmatmul.mubr.f32.gmra.mrb[0].mxu0 %v1566
        %v1634 = vpop.f32.mrb[0].mxu0
        %v1635 = vadd.f32 0.0, %v1634
        %v1636 = vpop.f32.mrb[0].mxu0
        %1637 = vdwg.mxu0
        %v1638 = vld [vmem:[#allocation13 + $0x18] sm:$0xff]
        %v1640 = vsel %vm744, %v1635, 0
        %1642 = vmatprep.subr.mxu0 0.0
        %1643 = vmatpush1.msra.mxu0 %v1638
        %1644 = vmatprep.subr.mxu0 0.0
        %1645 = vmatpush1.msra.mxu0 0.0
        %1646 = vmatprep.subr.mxu0 0.0
        %1647 = vmatpush1.msra.mxu0 0.0
        %1648 = vmatprep.subr.mxu0 0.0
        %1649 = vmatpush1.msra.mxu0 0.0
        %1650 = vmatprep.subr.mxu0 0.0
        %1651 = vmatpush1.msra.mxu0 0.0
        %1652 = vmatprep.subr.mxu0 0.0
        %1653 = vmatpush1.msra.mxu0 0.0
        %1654 = vmatprep.subr.mxu0 0.0
        %1655 = vmatpush1.msra.mxu0 0.0
        %1656 = vmatprep.subr.mxu0 0.0
        %1657 = vmatpush1.msra.mxu0 0.0
        %1658 = vmatprep.subr.mxu0 0.0
        %1659 = vmatpush1.msra.mxu0 0.0
        %1660 = vmatprep.subr.mxu0 0.0
        %1661 = vmatpush1.msra.mxu0 0.0
        %1662 = vmatprep.subr.mxu0 0.0
        %1663 = vmatpush1.msra.mxu0 0.0
        %1664 = vmatprep.subr.mxu0 0.0
        %1665 = vmatpush1.msra.mxu0 0.0
        %1666 = vmatprep.subr.mxu0 0.0
        %1667 = vmatpush1.msra.mxu0 0.0
        %1668 = vmatprep.subr.mxu0 0.0
        %1669 = vmatpush1.msra.mxu0 0.0
        %1670 = vmatprep.subr.mxu0 0.0
        %1671 = vmatpush1.msra.mxu0 0.0
        %1672 = vmatprep.subr.mxu0 0.0
        %1673 = vmatpush1.msra.mxu0 0.0
        %1674 = vmatprep.subr.mxu0 0.0
        %1675 = vmatpush1.msra.mxu0 0.0
        %1676 = vmatprep.subr.mxu0 0.0
        %1677 = vmatpush1.msra.mxu0 0.0
        %1678 = vmatprep.subr.mxu0 0.0
        %1679 = vmatpush1.msra.mxu0 0.0
        %1680 = vmatprep.subr.mxu0 0.0
        %1681 = vmatpush1.msra.mxu0 0.0
        %1682 = vmatprep.subr.mxu0 0.0
        %1683 = vmatpush1.msra.mxu0 0.0
        %1684 = vmatprep.subr.mxu0 0.0
        %1685 = vmatpush1.msra.mxu0 0.0
        %1686 = vmatprep.subr.mxu0 0.0
        %1687 = vmatpush1.msra.mxu0 0.0
        %1688 = vmatprep.subr.mxu0 0.0
        %1689 = vmatpush1.msra.mxu0 0.0
        %1690 = vmatprep.subr.mxu0 0.0
        %1691 = vmatpush1.msra.mxu0 0.0
        %1692 = vmatprep.subr.mxu0 0.0
        %1693 = vmatpush1.msra.mxu0 0.0
        %1694 = vmatprep.subr.mxu0 0.0
        %1695 = vmatpush1.msra.mxu0 0.0
        %1696 = vmatprep.subr.mxu0 0.0
        %1697 = vmatpush1.msra.mxu0 0.0
        %1698 = vmatprep.subr.mxu0 0.0
        %1699 = vmatpush1.msra.mxu0 0.0
        %1700 = vmatprep.subr.mxu0 0.0
        %1701 = vmatpush1.msra.mxu0 0.0
        %1702 = vmatprep.subr.mxu0 0.0
        %1703 = vmatpush1.msra.mxu0 0.0
        %1704 = vmatprep.subr.mxu0 0.0
        %1705 = vmatpush1.msra.mxu0 0.0
        %1706 = vmatprep.mubr.f32.mxu0 0.0
        %1707 = vmatmul.mubr.f32.gmra.mrb[0].mxu0 %v1640
        %v1708 = vpop.f32.mrb[0].mxu0
        %v1709 = vadd.f32 0.0, %v1708
        %v1710 = vpop.f32.mrb[0].mxu0
        %1711 = vdwg.mxu0
        %v1712 = vadd.f32 %v1469, %v1709
        %1713 = vst.msk [vmem:[%s493] sm:$0xff] %vm516, %v1712
        %s1714 = sand.u32 %s231, 1
        %s1715 = scalar_lea.sflag [#allocation4], %s1714
        %s1716 = sand.u32 %s231, 1
        %s1717 = smul.addr %s1716, 8
        %s1718 = scalar_lea.vmem [#allocation14], %s1717
        %s1719 = sand.u32 %s257, 1
        %s1720 = scalar_lea.sflag [#allocation16], %s1719
        %s1721 = sand.u32 %s257, 1
        %s1722 = smul.addr %s1721, 32
        %s1723 = scalar_lea.vmem [#allocation15], %s1722
        // Predicated region
        $region81: #{tpu_custom_call.1} parent=51 // pred_check
          %p1724 = pneg %p241
        $region82: #{tpu_custom_call.1} parent=51 // pred_check_branch
          %1726 = sbr.rel (%p1724) target = $region84
        $region83: #{tpu_custom_call.1} parent=51 // pred_region
          %s1728 = ssub.s32 128, 128
          %1729 = vsyncadd %s1715, %s1728
          %s1730 = smul.addr %s35, 128
          %s1731 = scalar_lea.hbm %s8, %s1730
          %s1733 = sshll.u32 %s1718, 4
          %s1734 = int_to_ptr.vmem [resolvable:$true] %s1733
          %1736 = dma.vmem_to_hbm [thread:$0]  %s1734, 128, %s1731, %s1715
        $region84: #{tpu_custom_call.1} parent=51 // pred_fallthru
          _
        // Predicated region
        $region85: #{tpu_custom_call.1} parent=51 // pred_check
          %p1737 = pneg %p267
        $region86: #{tpu_custom_call.1} parent=51 // pred_check_branch
          %1739 = sbr.rel (%p1737) target = $region88
        $region87: #{tpu_custom_call.1} parent=51 // pred_region
          %s1741 = ssub.s32 512, 512
          %1742 = vsyncadd %s1720, %s1741
          %s1743 = smul.addr %s35, 4
          %s1744 = smul.addr %s1743, 128
          %s1745 = scalar_lea.hbm %s9, %s1744
          %s1746 = sshll.u32 %s1723, 4
          %s1747 = int_to_ptr.vmem [resolvable:$true] %s1746
          %1752 = dma.vmem_to_hbm [thread:$0]  %s1747, 512, %s1745, %s1720, 128, 128, 8
        $region88: #{tpu_custom_call.1} parent=51 // pred_fallthru
          _
      $region52: #{tpu_custom_call.1} parent=5 // pred_fallthru
        _
      %p1753 = scmp.le.s32.totalorder 2, %s30
      // Predicated region
      $region89: #{tpu_custom_call.1} parent=5 // pred_check
        %p1754 = pneg %p1753
      $region90: #{tpu_custom_call.1} parent=5 // pred_check_branch
        %1756 = sbr.rel (%p1754) target = $region92
      $region91: #{tpu_custom_call.1} parent=5 // pred_region
        %s1757 = ssub.s32 %s30, 2
        // Predicated region
        $region93: #{tpu_custom_call.1} parent=91 // pred_check
          %p1758 = pneg %p247
        $region94: #{tpu_custom_call.1} parent=91 // pred_check_branch
          %1760 = sbr.rel (%p1758) target = $region96
        $region95: #{tpu_custom_call.1} parent=91 // pred_region
          %s1761 = sand.u32 %s232, 1
          %s1762 = scalar_lea.sflag [#allocation4], %s1761
          %s1763 = sand.u32 %s232, 1
          %s1764 = smul.addr %s1763, 8
          %s1765 = scalar_lea.vmem [#allocation14], %s1764
          %1766 = dma.done %s1762, 128
        $region96: #{tpu_custom_call.1} parent=91 // pred_fallthru
          _
        // Predicated region
        $region97: #{tpu_custom_call.1} parent=91 // pred_check
          %p1767 = pneg %p273
        $region98: #{tpu_custom_call.1} parent=91 // pred_check_branch
          %1769 = sbr.rel (%p1767) target = $region100
        $region99: #{tpu_custom_call.1} parent=91 // pred_region
          %s1770 = sand.u32 %s258, 1
          %s1771 = scalar_lea.sflag [#allocation16], %s1770
          %s1772 = sand.u32 %s258, 1
          %s1773 = smul.addr %s1772, 32
          %s1774 = scalar_lea.vmem [#allocation15], %s1773
          %1775 = dma.done %s1771, 512
        $region100: #{tpu_custom_call.1} parent=91 // pred_fallthru
          _
      $region92: #{tpu_custom_call.1} parent=5 // pred_fallthru
        _
    $region6: #{tpu_custom_call.1} parent=1 // loop_footer
      %s34 = sadd.s32 1, %s30
    $region7: #{tpu_custom_call.1} parent=1 // loop_footer_branch
      %29 = sbr.rel target = $region3
    $region8: #{tpu_custom_call.1} parent=1 // loop_exit
      _
    %1776 = vsyncpa [#allocation3], 1
    %s1777 = scalar_lea.sflag [#allocation3], 1
    %1778 = vsyncpa %s1777, 1
    %1779 = vsyncpa [#allocation6], 1
    %s1780 = scalar_lea.sflag [#allocation6], 1
    %1781 = vsyncpa %s1780, 1
    %1782 = vsyncpa [#allocation9], 1
    %1783 = vsyncpa [#allocation12], 1
    %1784 = vsyncpa [#allocation4], 1
    %s1785 = scalar_lea.sflag [#allocation4], 1
    %1786 = vsyncpa %s1785, 1
    %1787 = vsyncpa [#allocation16], 1
    %s1788 = scalar_lea.sflag [#allocation16], 1
    %1789 = vsyncpa %s1788, 1

</llo_original>
